<compile_context>
chip_gen: v7x
topology: tpu7x:2x2x1
jax: 0.10.0
libtpu: 0.0.40
codegen_flags: <defaults>
</compile_context>

<pallas_src>
import functools

import jax
import jax.numpy as jnp
from jax.experimental import pallas as pl
from jax.experimental.pallas import tpu as pltpu


def _round_up(x, m):
    return (x + m - 1) // m * m


# ----------------------------------------------------------------------------
# Pallas kernel 1:  out = act(X @ W + bias), tiled over M (conv-as-matmul)
# ----------------------------------------------------------------------------
def _matmul_bias_act_kernel(x_ref, w_ref, b_ref, o_ref, *, act):
    y = jnp.dot(x_ref[...], w_ref[...], preferred_element_type=jnp.float32)
    y = y + b_ref[...]                      # per-output-channel bias (BN folded)
    if act == "relu":
        y = jnp.maximum(y, 0.0)
    elif act == "tanh":
        y = jnp.tanh(y)
    o_ref[...] = y.astype(o_ref.dtype)


def matmul_bias_act(x, w, b, *, act="none", out_dtype=jnp.bfloat16, block_m=512):
    """x:(M,K) bf16, w:(K,Npad) bf16, b:(1,Npad) f32 -> (M,Npad) out_dtype.

    M is tiled on a 1-D "parallel" grid; W and bias are whole-array
    VMEM-resident blocks.  Npad must be a multiple of 128 (lane-dense stores).
    """
    M, K = x.shape
    K2, N = w.shape
    assert K == K2 and N % 128 == 0

    tm = min(block_m, _round_up(M, 32))
    mp = _round_up(M, tm)
    if mp != M:
        x = jnp.pad(x, ((0, mp - M), (0, 0)))

    out = pl.pallas_call(
        functools.partial(_matmul_bias_act_kernel, act=act),
        out_shape=jax.ShapeDtypeStruct((mp, N), out_dtype),
        grid_spec=pltpu.PrefetchScalarGridSpec(
            num_scalar_prefetch=0,
            grid=(mp // tm,),
            in_specs=[
                pl.BlockSpec((tm, K), lambda i: (i, 0)),   # X tile (pipelined)
                pl.BlockSpec((K, N), lambda i: (0, 0)),    # W resident
                pl.BlockSpec((1, N), lambda i: (0, 0)),    # bias resident
            ],
            out_specs=pl.BlockSpec((tm, N), lambda i: (i, 0)),
        ),
        compiler_params=pltpu.CompilerParams(
            dimension_semantics=("parallel",)),
    )(x, w, b)
    return out[:M] if mp != M else out


# ----------------------------------------------------------------------------
# Pallas kernel 2: fused FC head  tanh( relu(X @ W1 + b1) @ W2 + b2 )
# (hidden (B,512) activation never leaves VMEM)
# ----------------------------------------------------------------------------
def _fc_head_kernel(x_ref, w1_ref, b1_ref, w2_ref, b2_ref, o_ref):
    h = jnp.dot(x_ref[...], w1_ref[...], preferred_element_type=jnp.float32)
    h = jnp.maximum(h + b1_ref[...], 0.0)
    y = jnp.dot(h.astype(jnp.bfloat16), w2_ref[...],
                preferred_element_type=jnp.float32)
    o_ref[...] = jnp.tanh(y + b2_ref[...])


def fc_head(x, w1, b1, w2, b2):
    B, _ = x.shape
    _, N = w2.shape
    vmem = pl.BlockSpec(memory_space=pltpu.MemorySpace.VMEM)
    return pl.pallas_call(
        _fc_head_kernel,
        out_shape=jax.ShapeDtypeStruct((B, N), jnp.float32),
        in_specs=[vmem] * 5,
        out_specs=vmem,
    )(x, w1, b1, w2, b2)


# ----------------------------------------------------------------------------
# Glue: NHWC im2col (pure data movement, stays in XLA)
# ----------------------------------------------------------------------------
def im2col_nhwc(x, k, s):
    """x:(B,H,W,C) -> (B*OH*OW, k*k*C) with K ordered (kh, kw, c)."""
    B, H, W, C = x.shape
    OH = (H - k) // s + 1
    OW = (W - k) // s + 1
    rows = []
    for i in range(k):
        cols = [x[:, i:i + s * OH:s, j:j + s * OW:s, :] for j in range(k)]
        rows.append(jnp.stack(cols, axis=3))        # (B, OH, OW, kw, C)
    p = jnp.stack(rows, axis=3)                     # (B, OH, OW, kh, kw, C)
    return p.reshape(B * OH * OW, k * k * C), OH, OW


# ----------------------------------------------------------------------------
# Parameters: raw (PyTorch layout) init + one-time folding/packing
# ----------------------------------------------------------------------------
def _conv_out_hw(h, w, k, s):
    return (h - k) // s + 1, (w - k) // s + 1


def init_params(key, obs_size, act_size):
    H, W, C = obs_size                       # PyTorch: obs_action = (C, H, W)
    keys = iter(jax.random.split(key, 32))

    def conv_layer(cin, cout, k):
        return dict(
            w=0.05 * jax.random.normal(next(keys), (cout, cin, k, k), jnp.float32),
            b=0.05 * jax.random.normal(next(keys), (cout,), jnp.float32),
            gamma=1.0 + 0.1 * jax.random.normal(next(keys), (cout,), jnp.float32),
            beta=0.1 * jax.random.normal(next(keys), (cout,), jnp.float32),
            mean=0.1 * jax.random.normal(next(keys), (cout,), jnp.float32),
            var=jax.random.uniform(next(keys), (cout,), jnp.float32, 0.5, 1.5),
        )

    def fc_layer(fin, fout):
        return dict(
            w=0.05 * jax.random.normal(next(keys), (fout, fin), jnp.float32),
            b=0.05 * jax.random.normal(next(keys), (fout,), jnp.float32),
        )

    params = dict(
        conv1=conv_layer(C, 32, 8),
        conv2=conv_layer(32, 64, 4),
        conv3=conv_layer(64, 64, 3),
    )
    h, w = _conv_out_hw(H, W, 8, 4)
    h, w = _conv_out_hw(h, w, 4, 2)
    h, w = _conv_out_hw(h, w, 3, 1)
    params["fc1"] = fc_layer(64 * h * w, 512)
    params["fc2"] = fc_layer(512, act_size)
    return params


def prepare_params(raw, obs_size, eps=1e-5):
    """One-time fold: BN scale (+ /256 for conv1) into weights, transpose to
    (K, N) matmul layout, zero-pad N to 128, permute fc1 rows to NHWC order."""
    H, W, _C = obs_size
    h1, w1 = _conv_out_hw(H, W, 8, 4)
    h2, w2 = _conv_out_hw(h1, w1, 4, 2)
    h3, w3 = _conv_out_hw(h2, w2, 3, 1)

    def fold_conv(layer, extra_scale=1.0):
        w, b = layer["w"], layer["b"]
        cout, cin, kh, kw = w.shape
        s = layer["gamma"] / jnp.sqrt(layer["var"] + eps)          # BN scale
        wm = w.transpose(2, 3, 1, 0).reshape(kh * kw * cin, cout)  # (K, Cout)
        wm = wm * (s * extra_scale)[None, :]
        bias = (b - layer["mean"]) * s + layer["beta"]             # BN shift
        npad = _round_up(cout, 128)
        wm = jnp.pad(wm, ((0, 0), (0, npad - cout)))
        bias = jnp.pad(bias, (0, npad - cout))
        return dict(w=wm.astype(jnp.bfloat16),
                    b=bias.reshape(1, npad).astype(jnp.float32))

    p = dict(
        conv1=fold_conv(raw["conv1"], extra_scale=1.0 / 256.0),  # fold x/256
        conv2=fold_conv(raw["conv2"]),
        conv3=fold_conv(raw["conv3"]),
    )

    # fc1: permute rows from NCHW-flatten (c,h,w) to NHWC-flatten (h,w,c).
    fw1 = raw["fc1"]["w"]                                         # (512, 64*h3*w3)
    fw1 = fw1.reshape(512, 64, h3, w3).transpose(0, 2, 3, 1).reshape(512, -1)
    p["fc1_w"] = fw1.T.astype(jnp.bfloat16)                       # (K, 512)
    p["fc1_b"] = raw["fc1"]["b"].reshape(1, 512).astype(jnp.float32)

    # fc2: pad act_size -> 128 for lane-dense output.
    fw2 = raw["fc2"]["w"]                                         # (act, 512)
    act_size = fw2.shape[0]
    npad = _round_up(act_size, 128)
    p["fc2_w"] = jnp.pad(fw2.T, ((0, 0), (0, npad - act_size))).astype(jnp.bfloat16)
    p["fc2_b"] = jnp.pad(raw["fc2"]["b"],
                         (0, npad - act_size)).reshape(1, npad).astype(jnp.float32)
    return p


# ----------------------------------------------------------------------------
# Forward pass (mirrors DDPGActor.forward; eval-mode BN)
# ----------------------------------------------------------------------------
def ddpg_actor_forward(params, x, act_size):
    # x: (B, C, H, W) like PyTorch.  /256 is folded into conv1's weights.
    fx = jnp.transpose(x, (0, 2, 3, 1)).astype(jnp.bfloat16)      # NHWC, bf16
    B = fx.shape[0]

    y = fx
    for name, k, s, cout in (("conv1", 8, 4, 32),
                             ("conv2", 4, 2, 64),
                             ("conv3", 3, 1, 64)):
        layer = params[name]
        patches, OH, OW = im2col_nhwc(y, k, s)
        out = matmul_bias_act(patches, layer["w"], layer["b"], act="relu")
        y = out[:, :cout].reshape(B, OH, OW, cout)                # stay NHWC

    flat = y.reshape(B, -1)           # NHWC flatten (fc1 weights pre-permuted)
    out = fc_head(flat, params["fc1_w"], params["fc1_b"],
                  params["fc2_w"], params["fc2_b"])               # (B, 128) f32
    return out[:, :act_size]


# ----------------------------------------------------------------------------
if __name__ == "__main__":
    # Small but valid shapes for the conv stack: 36x36x3 obs, 3 actions, batch 2.
    obs_size = (36, 36, 3)   # (H, W, C) as in the PyTorch constructor
    act_size = 3
    batch = 2

    key = jax.random.PRNGKey(0)
    pkey, xkey = jax.random.split(key)
    raw_params = init_params(pkey, obs_size, act_size)
    params = prepare_params(raw_params, obs_size)

    # Input in NCHW like the PyTorch forward, values in [0, 255) (image-like).
    x = jax.random.uniform(
        xkey, (batch, obs_size[2], obs_size[0], obs_size[1]),
        dtype=jnp.float32, minval=0.0, maxval=255.0)

    fwd = jax.jit(ddpg_actor_forward, static_argnums=2)
    out = fwd(params, x, act_size)
    out = jax.block_until_ready(out)

    assert out.shape == (batch, act_size)
    assert bool(jnp.all(jnp.isfinite(out)))
    assert bool(jnp.all(jnp.abs(out) <= 1.0))   # tanh range
    print("KERNEL_OK")
</pallas_src>

<mosaic_0001>
module attributes {stable_mosaic.version = 11 : i64} {
  func.func @_matmul_bias_act_kernel(%arg0: i32, %arg1: memref<128x192xbf16, #tpu.memory_space<vmem>>, %arg2: memref<192x128xbf16, #tpu.memory_space<vmem>>, %arg3: memref<1x128xf32, #tpu.memory_space<vmem>>, %arg4: memref<128x128xbf16, #tpu.memory_space<vmem>>) attributes {dimension_semantics = [#tpu.dimension_semantics<parallel>], iteration_bounds = array<i64: 1>, scalar_prefetch = 0 : i64, scratch_operands = 0 : i64, tpu.core_type = #tpu.core_type<tc>, window_params = [{transform_indices = @transform_0, window_bounds = array<i64: 128, 192>}, {pipeline_mode = #tpu.pipeline_mode<synchronous>, transform_indices = @transform_1, window_bounds = array<i64: 192, 128>}, {pipeline_mode = #tpu.pipeline_mode<synchronous>, transform_indices = @transform_2, window_bounds = array<i64: 1, 128>}, {transform_indices = @transform_3, window_bounds = array<i64: 128, 128>}]} {
    %c0 = arith.constant 0 : index
    %c0_0 = arith.constant 0 : index
    %0 = vector.load %arg1[%c0, %c0_0] : memref<128x192xbf16, #tpu.memory_space<vmem>>, vector<128x192xbf16>
    %c0_1 = arith.constant 0 : index
    %c0_2 = arith.constant 0 : index
    %1 = vector.load %arg2[%c0_1, %c0_2] : memref<192x128xbf16, #tpu.memory_space<vmem>>, vector<192x128xbf16>
    %cst = arith.constant dense<0.000000e+00> : vector<128x128xf32>
    %2 = tpu.matmul %0, %1, %cst {dimension_numbers = #tpu.dot_dimension_numbers<[1], [0], [0], [1], [0, 0, 1, 1], [], []>} : vector<128x192xbf16>, vector<192x128xbf16>, vector<128x128xf32> -> vector<128x128xf32>
    %c0_3 = arith.constant 0 : index
    %c0_4 = arith.constant 0 : index
    %3 = vector.load %arg3[%c0_3, %c0_4] : memref<1x128xf32, #tpu.memory_space<vmem>>, vector<1x128xf32>
    %4 = vector.broadcast %3 : vector<1x128xf32> to vector<128x128xf32>
    %5 = arith.addf %2, %4 : vector<128x128xf32>
    %cst_5 = arith.constant 0.000000e+00 : f32
    %6 = vector.broadcast %cst_5 : f32 to vector<128x128xf32>
    %7 = arith.maximumf %5, %6 : vector<128x128xf32>
    %8 = arith.truncf %7 : vector<128x128xf32> to vector<128x128xbf16>
    %c0_6 = arith.constant 0 : index
    %c0_7 = arith.constant 0 : index
    %9 = vector.load %arg4[%c0_6, %c0_7] : memref<128x128xbf16, #tpu.memory_space<vmem>>, vector<128x128xbf16>
    tpu.vector_store %arg4[%c0_6, %c0_7], %8 {strides = array<i32>} : memref<128x128xbf16, #tpu.memory_space<vmem>>, vector<128x128xbf16>,
    return
  }
  func.func @transform_0(%arg0: i32) -> (i32, i32) {
    %c0_i32 = arith.constant 0 : i32
    %c0_i32_0 = arith.constant 0 : i32
    return %arg0, %c0_i32 : i32, i32
  }
  func.func @transform_1(%arg0: i32) -> (i32, i32) {
    %c0_i32 = arith.constant 0 : i32
    %c0_i32_0 = arith.constant 0 : i32
    %c0_i32_1 = arith.constant 0 : i32
    return %c0_i32, %c0_i32_0 : i32, i32
  }
  func.func @transform_2(%arg0: i32) -> (i32, i32) {
    %c0_i32 = arith.constant 0 : i32
    %c0_i32_0 = arith.constant 0 : i32
    %c0_i32_1 = arith.constant 0 : i32
    return %c0_i32, %c0_i32_0 : i32, i32
  }
  func.func @transform_3(%arg0: i32) -> (i32, i32) {
    %c0_i32 = arith.constant 0 : i32
    %c0_i32_0 = arith.constant 0 : i32
    return %arg0, %c0_i32 : i32, i32
  }
}

module attributes {stable_mosaic.version = 11 : i64} {
  func.func @_matmul_bias_act_kernel(%arg0: i32, %arg1: memref<32x512xbf16, #tpu.memory_space<vmem>>, %arg2: memref<512x128xbf16, #tpu.memory_space<vmem>>, %arg3: memref<1x128xf32, #tpu.memory_space<vmem>>, %arg4: memref<32x128xbf16, #tpu.memory_space<vmem>>) attributes {dimension_semantics = [#tpu.dimension_semantics<parallel>], iteration_bounds = array<i64: 1>, scalar_prefetch = 0 : i64, scratch_operands = 0 : i64, tpu.core_type = #tpu.core_type<tc>, window_params = [{transform_indices = @transform_0, window_bounds = array<i64: 32, 512>}, {pipeline_mode = #tpu.pipeline_mode<synchronous>, transform_indices = @transform_1, window_bounds = array<i64: 512, 128>}, {pipeline_mode = #tpu.pipeline_mode<synchronous>, transform_indices = @transform_2, window_bounds = array<i64: 1, 128>}, {transform_indices = @transform_3, window_bounds = array<i64: 32, 128>}]} {
    %c0 = arith.constant 0 : index
    %c0_0 = arith.constant 0 : index
    %0 = vector.load %arg1[%c0, %c0_0] : memref<32x512xbf16, #tpu.memory_space<vmem>>, vector<32x512xbf16>
    %c0_1 = arith.constant 0 : index
    %c0_2 = arith.constant 0 : index
    %1 = vector.load %arg2[%c0_1, %c0_2] : memref<512x128xbf16, #tpu.memory_space<vmem>>, vector<512x128xbf16>
    %cst = arith.constant dense<0.000000e+00> : vector<32x128xf32>
    %2 = tpu.matmul %0, %1, %cst {dimension_numbers = #tpu.dot_dimension_numbers<[1], [0], [0], [1], [0, 0, 1, 1], [], []>} : vector<32x512xbf16>, vector<512x128xbf16>, vector<32x128xf32> -> vector<32x128xf32>
    %c0_3 = arith.constant 0 : index
    %c0_4 = arith.constant 0 : index
    %3 = vector.load %arg3[%c0_3, %c0_4] : memref<1x128xf32, #tpu.memory_space<vmem>>, vector<1x128xf32>
    %4 = vector.broadcast %3 : vector<1x128xf32> to vector<32x128xf32>
    %5 = arith.addf %2, %4 : vector<32x128xf32>
    %cst_5 = arith.constant 0.000000e+00 : f32
    %6 = vector.broadcast %cst_5 : f32 to vector<32x128xf32>
    %7 = arith.maximumf %5, %6 : vector<32x128xf32>
    %8 = arith.truncf %7 : vector<32x128xf32> to vector<32x128xbf16>
    %c0_6 = arith.constant 0 : index
    %c0_7 = arith.constant 0 : index
    %9 = vector.load %arg4[%c0_6, %c0_7] : memref<32x128xbf16, #tpu.memory_space<vmem>>, vector<32x128xbf16>
    tpu.vector_store %arg4[%c0_6, %c0_7], %8 {strides = array<i32>} : memref<32x128xbf16, #tpu.memory_space<vmem>>, vector<32x128xbf16>,
    return
  }
  func.func @transform_0(%arg0: i32) -> (i32, i32) {
    %c0_i32 = arith.constant 0 : i32
    %c0_i32_0 = arith.constant 0 : i32
    return %arg0, %c0_i32 : i32, i32
  }
  func.func @transform_1(%arg0: i32) -> (i32, i32) {
    %c0_i32 = arith.constant 0 : i32
    %c0_i32_0 = arith.constant 0 : i32
    %c0_i32_1 = arith.constant 0 : i32
    return %c0_i32, %c0_i32_0 : i32, i32
  }
  func.func @transform_2(%arg0: i32) -> (i32, i32) {
    %c0_i32 = arith.constant 0 : i32
    %c0_i32_0 = arith.constant 0 : i32
    %c0_i32_1 = arith.constant 0 : i32
    return %c0_i32, %c0_i32_0 : i32, i32
  }
  func.func @transform_3(%arg0: i32) -> (i32, i32) {
    %c0_i32 = arith.constant 0 : i32
    %c0_i32_0 = arith.constant 0 : i32
    return %arg0, %c0_i32 : i32, i32
  }
}

module attributes {stable_mosaic.version = 11 : i64} {
  func.func @_matmul_bias_act_kernel(%arg0: i32, %arg1: memref<32x576xbf16, #tpu.memory_space<vmem>>, %arg2: memref<576x128xbf16, #tpu.memory_space<vmem>>, %arg3: memref<1x128xf32, #tpu.memory_space<vmem>>, %arg4: memref<32x128xbf16, #tpu.memory_space<vmem>>) attributes {dimension_semantics = [#tpu.dimension_semantics<parallel>], iteration_bounds = array<i64: 1>, scalar_prefetch = 0 : i64, scratch_operands = 0 : i64, tpu.core_type = #tpu.core_type<tc>, window_params = [{transform_indices = @transform_0, window_bounds = array<i64: 32, 576>}, {pipeline_mode = #tpu.pipeline_mode<synchronous>, transform_indices = @transform_1, window_bounds = array<i64: 576, 128>}, {pipeline_mode = #tpu.pipeline_mode<synchronous>, transform_indices = @transform_2, window_bounds = array<i64: 1, 128>}, {transform_indices = @transform_3, window_bounds = array<i64: 32, 128>}]} {
    %c0 = arith.constant 0 : index
    %c0_0 = arith.constant 0 : index
    %0 = vector.load %arg1[%c0, %c0_0] : memref<32x576xbf16, #tpu.memory_space<vmem>>, vector<32x576xbf16>
    %c0_1 = arith.constant 0 : index
    %c0_2 = arith.constant 0 : index
    %1 = vector.load %arg2[%c0_1, %c0_2] : memref<576x128xbf16, #tpu.memory_space<vmem>>, vector<576x128xbf16>
    %cst = arith.constant dense<0.000000e+00> : vector<32x128xf32>
    %2 = tpu.matmul %0, %1, %cst {dimension_numbers = #tpu.dot_dimension_numbers<[1], [0], [0], [1], [0, 0, 1, 1], [], []>} : vector<32x576xbf16>, vector<576x128xbf16>, vector<32x128xf32> -> vector<32x128xf32>
    %c0_3 = arith.constant 0 : index
    %c0_4 = arith.constant 0 : index
    %3 = vector.load %arg3[%c0_3, %c0_4] : memref<1x128xf32, #tpu.memory_space<vmem>>, vector<1x128xf32>
    %4 = vector.broadcast %3 : vector<1x128xf32> to vector<32x128xf32>
    %5 = arith.addf %2, %4 : vector<32x128xf32>
    %cst_5 = arith.constant 0.000000e+00 : f32
    %6 = vector.broadcast %cst_5 : f32 to vector<32x128xf32>
    %7 = arith.maximumf %5, %6 : vector<32x128xf32>
    %8 = arith.truncf %7 : vector<32x128xf32> to vector<32x128xbf16>
    %c0_6 = arith.constant 0 : index
    %c0_7 = arith.constant 0 : index
    %9 = vector.load %arg4[%c0_6, %c0_7] : memref<32x128xbf16, #tpu.memory_space<vmem>>, vector<32x128xbf16>
    tpu.vector_store %arg4[%c0_6, %c0_7], %8 {strides = array<i32>} : memref<32x128xbf16, #tpu.memory_space<vmem>>, vector<32x128xbf16>,
    return
  }
  func.func @transform_0(%arg0: i32) -> (i32, i32) {
    %c0_i32 = arith.constant 0 : i32
    %c0_i32_0 = arith.constant 0 : i32
    return %arg0, %c0_i32 : i32, i32
  }
  func.func @transform_1(%arg0: i32) -> (i32, i32) {
    %c0_i32 = arith.constant 0 : i32
    %c0_i32_0 = arith.constant 0 : i32
    %c0_i32_1 = arith.constant 0 : i32
    return %c0_i32, %c0_i32_0 : i32, i32
  }
  func.func @transform_2(%arg0: i32) -> (i32, i32) {
    %c0_i32 = arith.constant 0 : i32
    %c0_i32_0 = arith.constant 0 : i32
    %c0_i32_1 = arith.constant 0 : i32
    return %c0_i32, %c0_i32_0 : i32, i32
  }
  func.func @transform_3(%arg0: i32) -> (i32, i32) {
    %c0_i32 = arith.constant 0 : i32
    %c0_i32_0 = arith.constant 0 : i32
    return %arg0, %c0_i32 : i32, i32
  }
}

module attributes {stable_mosaic.version = 11 : i64} {
  func.func @_fc_head_kernel(%arg0: memref<2x64xbf16, #tpu.memory_space<vmem>>, %arg1: memref<64x512xbf16, #tpu.memory_space<vmem>>, %arg2: memref<1x512xf32, #tpu.memory_space<vmem>>, %arg3: memref<512x128xbf16, #tpu.memory_space<vmem>>, %arg4: memref<1x128xf32, #tpu.memory_space<vmem>>, %arg5: memref<2x128xf32, #tpu.memory_space<vmem>>) attributes {dimension_semantics = [], scalar_prefetch = 0 : i64, scratch_operands = 0 : i64, tpu.core_type = #tpu.core_type<tc>} {
    %c0 = arith.constant 0 : index
    %c0_0 = arith.constant 0 : index
    %0 = vector.load %arg0[%c0, %c0_0] : memref<2x64xbf16, #tpu.memory_space<vmem>>, vector<2x64xbf16>
    %c0_1 = arith.constant 0 : index
    %c0_2 = arith.constant 0 : index
    %1 = vector.load %arg1[%c0_1, %c0_2] : memref<64x512xbf16, #tpu.memory_space<vmem>>, vector<64x512xbf16>
    %cst = arith.constant dense<0.000000e+00> : vector<2x512xf32>
    %2 = tpu.matmul %0, %1, %cst {dimension_numbers = #tpu.dot_dimension_numbers<[1], [0], [0], [1], [0, 0, 1, 1], [], []>} : vector<2x64xbf16>, vector<64x512xbf16>, vector<2x512xf32> -> vector<2x512xf32>
    %c0_3 = arith.constant 0 : index
    %c0_4 = arith.constant 0 : index
    %3 = vector.load %arg2[%c0_3, %c0_4] : memref<1x512xf32, #tpu.memory_space<vmem>>, vector<1x512xf32>
    %4 = vector.broadcast %3 : vector<1x512xf32> to vector<2x512xf32>
    %5 = arith.addf %2, %4 : vector<2x512xf32>
    %cst_5 = arith.constant 0.000000e+00 : f32
    %6 = vector.broadcast %cst_5 : f32 to vector<2x512xf32>
    %7 = arith.maximumf %5, %6 : vector<2x512xf32>
    %8 = arith.truncf %7 : vector<2x512xf32> to vector<2x512xbf16>
    %c0_6 = arith.constant 0 : index
    %c0_7 = arith.constant 0 : index
    %9 = vector.load %arg3[%c0_6, %c0_7] : memref<512x128xbf16, #tpu.memory_space<vmem>>, vector<512x128xbf16>
    %cst_8 = arith.constant dense<0.000000e+00> : vector<2x128xf32>
    %10 = tpu.matmul %8, %9, %cst_8 {dimension_numbers = #tpu.dot_dimension_numbers<[1], [0], [0], [1], [0, 0, 1, 1], [], []>} : vector<2x512xbf16>, vector<512x128xbf16>, vector<2x128xf32> -> vector<2x128xf32>
    %c0_9 = arith.constant 0 : index
    %c0_10 = arith.constant 0 : index
    %11 = vector.load %arg4[%c0_9, %c0_10] : memref<1x128xf32, #tpu.memory_space<vmem>>, vector<1x128xf32>
    %12 = vector.broadcast %11 : vector<1x128xf32> to vector<2x128xf32>
    %13 = arith.addf %10, %12 : vector<2x128xf32>
    %14 = math.tanh %13 : vector<2x128xf32>
    %c0_11 = arith.constant 0 : index
    %c0_12 = arith.constant 0 : index
    %15 = vector.load %arg5[%c0_11, %c0_12] : memref<2x128xf32, #tpu.memory_space<vmem>>, vector<2x128xf32>
    tpu.vector_store %arg5[%c0_11, %c0_12], %14 {strides = array<i32>} : memref<2x128xf32, #tpu.memory_space<vmem>>, vector<2x128xf32>,
    return
  }
}

</mosaic_0001>

<llo_original>
// kernel: ddpg_actor_forward.4
$region0: #{ddpg_actor_forward.4}
  #allocation0 [shape = 'u32[]', space=smem, size = 0x4, offset = 0x4, fixed_abs, tag = 'smem constant byte address 0x4 - core index']
  #allocation1 [shape = 'u32[144,128]{1,0:T(1,128)}', space=vmem, size = 0x12000, scoped, tag = 'internal scratch']
  %s0 = inlined_call_operand.vmem [shape: bf16[128,192], index: 0, kind: input, shape index: {}]
  %s1 = inlined_call_operand.vmem [shape: bf16[192,128], index: 1, kind: input, shape index: {}]
  %s2 = inlined_call_operand.vmem [shape: f32[1,128], index: 2, kind: input, shape index: {}]
  %s3 = inlined_call_operand.vmem [shape: bf16[128,128], index: 3, kind: output, shape index: {}]
  %s4 = sld [smem:[#allocation0]]
  $region22: #{ddpg_actor_forward.4} parent=0
    _
  %s6 = ssub.s32 1, %s4
  %s7 = scalar_select 0, %s6, %s4
  // Predicated region
  $region2: #{ddpg_actor_forward.4} parent=0 // pred_check
    _
  $region3: #{ddpg_actor_forward.4} parent=0 // pred_check_branch
    %9 = sbr.rel (0) target = $region5
  $region4: #{ddpg_actor_forward.4} parent=0 // pred_region
    _
  $region5: #{ddpg_actor_forward.4} parent=0 // pred_fallthru
    _
  // Predicated region
  $region6: #{ddpg_actor_forward.4} parent=0 // pred_check
    _
  $region7: #{ddpg_actor_forward.4} parent=0 // pred_check_branch
    %11 = sbr.rel (0) target = $region9
  $region8: #{ddpg_actor_forward.4} parent=0 // pred_region
    _
  $region9: #{ddpg_actor_forward.4} parent=0 // pred_fallthru
    _
  // Predicated region
  $region10: #{ddpg_actor_forward.4} parent=0 // pred_check
    _
  $region11: #{ddpg_actor_forward.4} parent=0 // pred_check_branch
    %13 = sbr.rel (0) target = $region13
  $region12: #{ddpg_actor_forward.4} parent=0 // pred_region
    _
  $region13: #{ddpg_actor_forward.4} parent=0 // pred_fallthru
    _
  %v15 = vld [vmem:[%s0] sm:$0xff]
  %v16 = vld [vmem:[%s0 + $0x8] sm:$0xff]
  %v17 = vld [vmem:[%s0 + $0x10] sm:$0xff]
  %v18 = vld [vmem:[%s0 + $0x18] sm:$0xff]
  %v19 = vld [vmem:[%s0 + $0x20] sm:$0xff]
  %v20 = vld [vmem:[%s0 + $0x28] sm:$0xff]
  %v21 = vld [vmem:[%s0 + $0x30] sm:$0xff]
  %v22 = vld [vmem:[%s0 + $0x38] sm:$0xff]
  %v23 = vld [vmem:[%s0 + $0x40] sm:$0xff]
  %v24 = vld [vmem:[%s0 + $0x48] sm:$0xff]
  %v25 = vld [vmem:[%s0 + $0x50] sm:$0xff]
  %v26 = vld [vmem:[%s0 + $0x58] sm:$0xff]
  %v27 = vld [vmem:[%s0 + $0x60] sm:$0xff]
  %v28 = vld [vmem:[%s0 + $0x68] sm:$0xff]
  %v29 = vld [vmem:[%s0 + $0x70] sm:$0xff]
  %v30 = vld [vmem:[%s0 + $0x78] sm:$0xff]
  %v31 = vld [vmem:[%s1] sm:$0xf]
  %v32 = vld [vmem:[%s1 + $0x4] sm:$0xf]
  %v33 = vld [vmem:[%s1 + $0x8] sm:$0xf]
  %v34 = vld [vmem:[%s1 + $0xc] sm:$0xf]
  %v35 = vld [vmem:[%s1 + $0x10] sm:$0xf]
  %v36 = vld [vmem:[%s1 + $0x14] sm:$0xf]
  %v37 = vld [vmem:[%s1 + $0x18] sm:$0xf]
  %v38 = vld [vmem:[%s1 + $0x1c] sm:$0xf]
  %v39 = vld [vmem:[%s1 + $0x20] sm:$0xf]
  %v40 = vld [vmem:[%s1 + $0x24] sm:$0xf]
  %v41 = vld [vmem:[%s1 + $0x28] sm:$0xf]
  %v42 = vld [vmem:[%s1 + $0x2c] sm:$0xf]
  %v43 = vld [vmem:[%s1 + $0x30] sm:$0xf]
  %v44 = vld [vmem:[%s1 + $0x34] sm:$0xf]
  %v45 = vld [vmem:[%s1 + $0x38] sm:$0xf]
  %v46 = vld [vmem:[%s1 + $0x3c] sm:$0xf]
  %v47 = vld [vmem:[%s1 + $0x40] sm:$0xf]
  %v48 = vld [vmem:[%s1 + $0x44] sm:$0xf]
  %v49 = vld [vmem:[%s1 + $0x48] sm:$0xf]
  %v50 = vld [vmem:[%s1 + $0x4c] sm:$0xf]
  %v51 = vld [vmem:[%s1 + $0x50] sm:$0xf]
  %v52 = vld [vmem:[%s1 + $0x54] sm:$0xf]
  %v53 = vld [vmem:[%s1 + $0x58] sm:$0xf]
  %v54 = vld [vmem:[%s1 + $0x5c] sm:$0xf]
  %v55 = vld [vmem:[%s2] sm:$0x1]
  %v57 = vlaneseq
  %v58 = vshrl.u32 %v57, 7
  %v59 = vsub.s32 0, %v58
  %v60 = vrot.slane %v55, %v59
  %v78 = vunpack.c.l.b16 %v15
  %v79 = vunpack.c.h.b16 %v15
  %v80 = vunpack.c.l.b16 %v16
  %v81 = vunpack.c.h.b16 %v16
  %v82 = vunpack.c.l.b16 %v17
  %v83 = vunpack.c.h.b16 %v17
  %v84 = vunpack.c.l.b16 %v18
  %v85 = vunpack.c.h.b16 %v18
  %v86 = vunpack.c.l.b16 %v19
  %v87 = vunpack.c.h.b16 %v19
  %v88 = vunpack.c.l.b16 %v20
  %v89 = vunpack.c.h.b16 %v20
  %v90 = vunpack.c.l.b16 %v21
  %v91 = vunpack.c.h.b16 %v21
  %v92 = vunpack.c.l.b16 %v22
  %v93 = vunpack.c.h.b16 %v22
  %v94 = vunpack.c.l.b16 %v23
  %v95 = vunpack.c.h.b16 %v23
  %v96 = vunpack.c.l.b16 %v24
  %v97 = vunpack.c.h.b16 %v24
  %v98 = vunpack.c.l.b16 %v25
  %v99 = vunpack.c.h.b16 %v25
  %v100 = vunpack.c.l.b16 %v26
  %v101 = vunpack.c.h.b16 %v26
  %v102 = vunpack.c.l.b16 %v27
  %v103 = vunpack.c.h.b16 %v27
  %v104 = vunpack.c.l.b16 %v28
  %v105 = vunpack.c.h.b16 %v28
  %v106 = vunpack.c.l.b16 %v29
  %v107 = vunpack.c.h.b16 %v29
  %v108 = vunpack.c.l.b16 %v30
  %v109 = vunpack.c.h.b16 %v30
  %v110 = vpack.c.b16 %v80, %v78
  %v111 = vpack.c.b16 %v81, %v79
  %v112 = vpack.c.b16 %v84, %v82
  %v113 = vpack.c.b16 %v85, %v83
  %v114 = vpack.c.b16 %v88, %v86
  %v115 = vpack.c.b16 %v89, %v87
  %v116 = vpack.c.b16 %v92, %v90
  %v117 = vpack.c.b16 %v93, %v91
  %v118 = vpack.c.b16 %v96, %v94
  %v119 = vpack.c.b16 %v97, %v95
  %v120 = vpack.c.b16 %v100, %v98
  %v121 = vpack.c.b16 %v101, %v99
  %v122 = vpack.c.b16 %v104, %v102
  %v123 = vpack.c.b16 %v105, %v103
  %v124 = vpack.c.b16 %v108, %v106
  %v125 = vpack.c.b16 %v109, %v107
  %v158 = vunpack.c.l.b16 %v31
  %v159 = vunpack.c.l.b16 %v32
  %v160 = vunpack.c.l.b16 %v33
  %v161 = vunpack.c.l.b16 %v34
  %v162 = vunpack.c.l.b16 %v35
  %v163 = vunpack.c.l.b16 %v36
  %v164 = vunpack.c.l.b16 %v37
  %v165 = vunpack.c.l.b16 %v38
  %v166 = vunpack.c.l.b16 %v39
  %v167 = vunpack.c.l.b16 %v40
  %v168 = vunpack.c.l.b16 %v41
  %v169 = vunpack.c.l.b16 %v42
  %v170 = vunpack.c.l.b16 %v43
  %v171 = vunpack.c.l.b16 %v44
  %v172 = vunpack.c.l.b16 %v45
  %v173 = vunpack.c.l.b16 %v46
  %v174 = vunpack.c.l.b16 %v47
  %v175 = vunpack.c.l.b16 %v48
  %v176 = vunpack.c.l.b16 %v49
  %v177 = vunpack.c.l.b16 %v50
  %v178 = vunpack.c.l.b16 %v51
  %v179 = vunpack.c.l.b16 %v52
  %v180 = vunpack.c.l.b16 %v53
  %v181 = vunpack.c.l.b16 %v54
  %v182 = vpack.c.b16 %v159, %v158
  %v183 = vpack.c.b16 %v161, %v160
  %v184 = vpack.c.b16 %v163, %v162
  %v185 = vpack.c.b16 %v165, %v164
  %v186 = vpack.c.b16 %v167, %v166
  %v187 = vpack.c.b16 %v169, %v168
  %v188 = vpack.c.b16 %v171, %v170
  %v189 = vpack.c.b16 %v173, %v172
  %v190 = vpack.c.b16 %v175, %v174
  %v191 = vpack.c.b16 %v177, %v176
  %v192 = vpack.c.b16 %v179, %v178
  %v193 = vpack.c.b16 %v181, %v180
  %vm206 = vcmask 523264
  %v208 = vsel %vm206, %v111, 0
  %v211 = vsel %vm206, %v113, 0
  %v214 = vsel %vm206, %v115, 0
  %v217 = vsel %vm206, %v117, 0
  %v220 = vsel %vm206, %v119, 0
  %v223 = vsel %vm206, %v121, 0
  %v226 = vsel %vm206, %v123, 0
  %v229 = vsel %vm206, %v125, 0
  %231 = vmatprep.subr.bf16.mxu0 0
  %232 = vmatpush1.bf16.msra.mxu0 %v182
  %233 = vmatprep.subr.bf16.mxu0 0
  %234 = vmatpush1.bf16.msra.mxu0 %v183
  %235 = vmatprep.subr.bf16.mxu0 0
  %236 = vmatpush1.bf16.msra.mxu0 %v184
  %237 = vmatprep.subr.bf16.mxu0 0
  %238 = vmatpush1.bf16.msra.mxu0 %v185
  %239 = vmatprep.subr.bf16.mxu0 0
  %240 = vmatpush1.bf16.msra.mxu0 %v186
  %241 = vmatprep.subr.bf16.mxu0 0
  %242 = vmatpush1.bf16.msra.mxu0 %v187
  %243 = vmatprep.subr.bf16.mxu0 0
  %244 = vmatpush1.bf16.msra.mxu0 %v188
  %245 = vmatprep.subr.bf16.mxu0 0
  %246 = vmatpush1.bf16.msra.mxu0 %v189
  %247 = vmatprep.subr.bf16.mxu0 0
  %248 = vmatpush1.bf16.msra.mxu0 %v190
  %249 = vmatprep.subr.bf16.mxu0 0
  %250 = vmatpush1.bf16.msra.mxu0 %v191
  %251 = vmatprep.subr.bf16.mxu0 0
  %252 = vmatpush1.bf16.msra.mxu0 %v192
  %253 = vmatprep.subr.bf16.mxu0 0
  %254 = vmatpush1.bf16.msra.mxu0 %v193
  %255 = vmatprep.subr.bf16.mxu0 0
  %256 = vmatpush1.bf16.msra.mxu0 0
  %257 = vmatprep.subr.bf16.mxu0 0
  %258 = vmatpush1.bf16.msra.mxu0 0
  %259 = vmatprep.subr.bf16.mxu0 0
  %260 = vmatpush1.bf16.msra.mxu0 0
  %261 = vmatprep.subr.bf16.mxu0 0
  %262 = vmatpush1.bf16.msra.mxu0 0
  %263 = vmatprep.mubr.bf16.mxu0 %v208
  %264 = vmatmul.mubr.bf16.gmra.mrb[0].mxu0 %v110
  %v265 = vpop.f32.mrb[0].mxu0
  %v266 = vadd.f32 %v60, %v265
  %v267 = vpop.f32.mrb[0].mxu0
  %v268 = vpop.f32.mrb[0].mxu0
  %v269 = vadd.f32 %v60, %v268
  %v270 = vpop.f32.mrb[0].mxu0
  %271 = vmatprep.mubr.bf16.mxu0 %v211
  %272 = vmatmul.mubr.bf16.gmra.mrb[0].mxu0 %v112
  %v273 = vpop.f32.mrb[0].mxu0
  %v274 = vadd.f32 %v60, %v273
  %v275 = vpop.f32.mrb[0].mxu0
  %v276 = vpop.f32.mrb[0].mxu0
  %v277 = vadd.f32 %v60, %v276
  %v278 = vpop.f32.mrb[0].mxu0
  %279 = vmatprep.mubr.bf16.mxu0 %v214
  %280 = vmatmul.mubr.bf16.gmra.mrb[0].mxu0 %v114
  %v281 = vpop.f32.mrb[0].mxu0
  %v282 = vadd.f32 %v60, %v281
  %v283 = vpop.f32.mrb[0].mxu0
  %v284 = vpop.f32.mrb[0].mxu0
  %v285 = vadd.f32 %v60, %v284
  %v286 = vpop.f32.mrb[0].mxu0
  %287 = vmatprep.mubr.bf16.mxu0 %v217
  %288 = vmatmul.mubr.bf16.gmra.mrb[0].mxu0 %v116
  %v289 = vpop.f32.mrb[0].mxu0
  %v290 = vadd.f32 %v60, %v289
  %v291 = vpop.f32.mrb[0].mxu0
  %v292 = vpop.f32.mrb[0].mxu0
  %v293 = vadd.f32 %v60, %v292
  %v294 = vpop.f32.mrb[0].mxu0
  %295 = vmatprep.mubr.bf16.mxu0 %v220
  %296 = vmatmul.mubr.bf16.gmra.mrb[0].mxu0 %v118
  %v297 = vpop.f32.mrb[0].mxu0
  %v298 = vadd.f32 %v60, %v297
  %v299 = vpop.f32.mrb[0].mxu0
  %v300 = vpop.f32.mrb[0].mxu0
  %v301 = vadd.f32 %v60, %v300
  %v302 = vpop.f32.mrb[0].mxu0
  %303 = vmatprep.mubr.bf16.mxu0 %v223
  %304 = vmatmul.mubr.bf16.gmra.mrb[0].mxu0 %v120
  %v305 = vpop.f32.mrb[0].mxu0
  %v306 = vadd.f32 %v60, %v305
  %v307 = vpop.f32.mrb[0].mxu0
  %v308 = vpop.f32.mrb[0].mxu0
  %v309 = vadd.f32 %v60, %v308
  %v310 = vpop.f32.mrb[0].mxu0
  %311 = vmatprep.mubr.bf16.mxu0 %v226
  %312 = vmatmul.mubr.bf16.gmra.mrb[0].mxu0 %v122
  %v313 = vpop.f32.mrb[0].mxu0
  %v314 = vadd.f32 %v60, %v313
  %v315 = vpop.f32.mrb[0].mxu0
  %v316 = vpop.f32.mrb[0].mxu0
  %v317 = vadd.f32 %v60, %v316
  %v318 = vpop.f32.mrb[0].mxu0
  %319 = vmatprep.mubr.bf16.mxu0 %v229
  %320 = vmatmul.mubr.bf16.gmra.mrb[0].mxu0 %v124
  %v321 = vpop.f32.mrb[0].mxu0
  %v322 = vadd.f32 %v60, %v321
  %v323 = vpop.f32.mrb[0].mxu0
  %v324 = vpop.f32.mrb[0].mxu0
  %v325 = vadd.f32 %v60, %v324
  %v326 = vpop.f32.mrb[0].mxu0
  %327 = vdwg.mxu0
  %v328 = vmax.f32 %v266, 0.0
  %v329 = vmax.f32 %v269, 0.0
  %v330 = vmax.f32 %v274, 0.0
  %v331 = vmax.f32 %v277, 0.0
  %v332 = vmax.f32 %v282, 0.0
  %v333 = vmax.f32 %v285, 0.0
  %v334 = vmax.f32 %v290, 0.0
  %v335 = vmax.f32 %v293, 0.0
  %v336 = vmax.f32 %v298, 0.0
  %v337 = vmax.f32 %v301, 0.0
  %v338 = vmax.f32 %v306, 0.0
  %v339 = vmax.f32 %v309, 0.0
  %v340 = vmax.f32 %v314, 0.0
  %v341 = vmax.f32 %v317, 0.0
  %v342 = vmax.f32 %v322, 0.0
  %v343 = vmax.f32 %v325, 0.0
  %v344 = vpack.c.bf16 %v329, %v328
  %v345 = vpack.c.bf16 %v331, %v330
  %v346 = vpack.c.bf16 %v333, %v332
  %v347 = vpack.c.bf16 %v335, %v334
  %v348 = vpack.c.bf16 %v337, %v336
  %v349 = vpack.c.bf16 %v339, %v338
  %v350 = vpack.c.bf16 %v341, %v340
  %v351 = vpack.c.bf16 %v343, %v342
  %v360 = vunpack.c.l.b16 %v344
  %v361 = vunpack.c.h.b16 %v344
  %v362 = vunpack.c.l.b16 %v345
  %v363 = vunpack.c.h.b16 %v345
  %v364 = vunpack.c.l.b16 %v346
  %v365 = vunpack.c.h.b16 %v346
  %v366 = vunpack.c.l.b16 %v347
  %v367 = vunpack.c.h.b16 %v347
  %v368 = vunpack.c.l.b16 %v348
  %v369 = vunpack.c.h.b16 %v348
  %v370 = vunpack.c.l.b16 %v349
  %v371 = vunpack.c.h.b16 %v349
  %v372 = vunpack.c.l.b16 %v350
  %v373 = vunpack.c.h.b16 %v350
  %v374 = vunpack.c.l.b16 %v351
  %v375 = vunpack.c.h.b16 %v351
  %v376 = vpack.c.b16 %v360, %v360
  %v377 = vpack.c.b16 %v361, %v361
  %v378 = vpack.c.b16 %v362, %v362
  %v379 = vpack.c.b16 %v363, %v363
  %v380 = vpack.c.b16 %v364, %v364
  %v381 = vpack.c.b16 %v365, %v365
  %v382 = vpack.c.b16 %v366, %v366
  %v383 = vpack.c.b16 %v367, %v367
  %v384 = vpack.c.b16 %v368, %v368
  %v385 = vpack.c.b16 %v369, %v369
  %v386 = vpack.c.b16 %v370, %v370
  %v387 = vpack.c.b16 %v371, %v371
  %v388 = vpack.c.b16 %v372, %v372
  %v389 = vpack.c.b16 %v373, %v373
  %v390 = vpack.c.b16 %v374, %v374
  %v391 = vpack.c.b16 %v375, %v375
  %408 = vst [vmem:[%s3] sm:$0xf] %v376
  %409 = vst [vmem:[%s3 + $0x4] sm:$0xf] %v377
  %410 = vst [vmem:[%s3 + $0x8] sm:$0xf] %v378
  %411 = vst [vmem:[%s3 + $0xc] sm:$0xf] %v379
  %412 = vst [vmem:[%s3 + $0x10] sm:$0xf] %v380
  %413 = vst [vmem:[%s3 + $0x14] sm:$0xf] %v381
  %414 = vst [vmem:[%s3 + $0x18] sm:$0xf] %v382
  %415 = vst [vmem:[%s3 + $0x1c] sm:$0xf] %v383
  %416 = vst [vmem:[%s3 + $0x20] sm:$0xf] %v384
  %417 = vst [vmem:[%s3 + $0x24] sm:$0xf] %v385
  %418 = vst [vmem:[%s3 + $0x28] sm:$0xf] %v386
  %419 = vst [vmem:[%s3 + $0x2c] sm:$0xf] %v387
  %420 = vst [vmem:[%s3 + $0x30] sm:$0xf] %v388
  %421 = vst [vmem:[%s3 + $0x34] sm:$0xf] %v389
  %422 = vst [vmem:[%s3 + $0x38] sm:$0xf] %v390
  %423 = vst [vmem:[%s3 + $0x3c] sm:$0xf] %v391
  // Predicated region
  $region14: #{ddpg_actor_forward.4} parent=0 // pred_check
    _
  $region15: #{ddpg_actor_forward.4} parent=0 // pred_check_branch
    %425 = sbr.rel (0) target = $region17
  $region16: #{ddpg_actor_forward.4} parent=0 // pred_region
    _
  $region17: #{ddpg_actor_forward.4} parent=0 // pred_fallthru
    _
  // Predicated region
  $region18: #{ddpg_actor_forward.4} parent=0 // pred_check
    _
  $region19: #{ddpg_actor_forward.4} parent=0 // pred_check_branch
    %427 = sbr.rel (0) target = $region21
  $region20: #{ddpg_actor_forward.4} parent=0 // pred_region
    _
  $region21: #{ddpg_actor_forward.4} parent=0 // pred_fallthru
    _

// kernel: ddpg_actor_forward.5
$region0: #{ddpg_actor_forward.5}
  #allocation0 [shape = 'u32[]', space=smem, size = 0x4, offset = 0x4, fixed_abs, tag = 'smem constant byte address 0x4 - core index']
  #allocation1 [shape = 'u32[144,128]{1,0:T(1,128)}', space=vmem, size = 0x12000, scoped, tag = 'internal scratch']
  %s0 = inlined_call_operand.vmem [shape: bf16[32,512], index: 0, kind: input, shape index: {}]
  %s1 = inlined_call_operand.vmem [shape: bf16[512,128], index: 1, kind: input, shape index: {}]
  %s2 = inlined_call_operand.vmem [shape: f32[1,128], index: 2, kind: input, shape index: {}]
  %s3 = inlined_call_operand.vmem [shape: bf16[32,128], index: 3, kind: output, shape index: {}]
  %s4 = sld [smem:[#allocation0]]
  $region22: #{ddpg_actor_forward.5} parent=0
    _
  %s6 = ssub.s32 1, %s4
  %s7 = scalar_select 0, %s6, %s4
  // Predicated region
  $region2: #{ddpg_actor_forward.5} parent=0 // pred_check
    _
  $region3: #{ddpg_actor_forward.5} parent=0 // pred_check_branch
    %9 = sbr.rel (0) target = $region5
  $region4: #{ddpg_actor_forward.5} parent=0 // pred_region
    _
  $region5: #{ddpg_actor_forward.5} parent=0 // pred_fallthru
    _
  // Predicated region
  $region6: #{ddpg_actor_forward.5} parent=0 // pred_check
    _
  $region7: #{ddpg_actor_forward.5} parent=0 // pred_check_branch
    %11 = sbr.rel (0) target = $region9
  $region8: #{ddpg_actor_forward.5} parent=0 // pred_region
    _
  $region9: #{ddpg_actor_forward.5} parent=0 // pred_fallthru
    _
  // Predicated region
  $region10: #{ddpg_actor_forward.5} parent=0 // pred_check
    _
  $region11: #{ddpg_actor_forward.5} parent=0 // pred_check_branch
    %13 = sbr.rel (0) target = $region13
  $region12: #{ddpg_actor_forward.5} parent=0 // pred_region
    _
  $region13: #{ddpg_actor_forward.5} parent=0 // pred_fallthru
    _
  %v15 = vld [vmem:[%s0] sm:$0xff]
  %v16 = vld [vmem:[%s0 + $0x8] sm:$0xff]
  %v17 = vld [vmem:[%s0 + $0x10] sm:$0xff]
  %v18 = vld [vmem:[%s0 + $0x18] sm:$0xff]
  %v19 = vld [vmem:[%s0 + $0x20] sm:$0xff]
  %v20 = vld [vmem:[%s0 + $0x28] sm:$0xff]
  %v21 = vld [vmem:[%s0 + $0x30] sm:$0xff]
  %v22 = vld [vmem:[%s0 + $0x38] sm:$0xff]
  %v23 = vld [vmem:[%s1] sm:$0xf]
  %v24 = vld [vmem:[%s1 + $0x4] sm:$0xf]
  %v25 = vld [vmem:[%s1 + $0x8] sm:$0xf]
  %v26 = vld [vmem:[%s1 + $0xc] sm:$0xf]
  %v27 = vld [vmem:[%s1 + $0x10] sm:$0xf]
  %v28 = vld [vmem:[%s1 + $0x14] sm:$0xf]
  %v29 = vld [vmem:[%s1 + $0x18] sm:$0xf]
  %v30 = vld [vmem:[%s1 + $0x1c] sm:$0xf]
  %v31 = vld [vmem:[%s1 + $0x20] sm:$0xf]
  %v32 = vld [vmem:[%s1 + $0x24] sm:$0xf]
  %v33 = vld [vmem:[%s1 + $0x28] sm:$0xf]
  %v34 = vld [vmem:[%s1 + $0x2c] sm:$0xf]
  %v35 = vld [vmem:[%s1 + $0x30] sm:$0xf]
  %v36 = vld [vmem:[%s1 + $0x34] sm:$0xf]
  %v37 = vld [vmem:[%s1 + $0x38] sm:$0xf]
  %v38 = vld [vmem:[%s1 + $0x3c] sm:$0xf]
  %v39 = vld [vmem:[%s1 + $0x40] sm:$0xf]
  %v40 = vld [vmem:[%s1 + $0x44] sm:$0xf]
  %v41 = vld [vmem:[%s1 + $0x48] sm:$0xf]
  %v42 = vld [vmem:[%s1 + $0x4c] sm:$0xf]
  %v43 = vld [vmem:[%s1 + $0x50] sm:$0xf]
  %v44 = vld [vmem:[%s1 + $0x54] sm:$0xf]
  %v45 = vld [vmem:[%s1 + $0x58] sm:$0xf]
  %v46 = vld [vmem:[%s1 + $0x5c] sm:$0xf]
  %v47 = vld [vmem:[%s1 + $0x60] sm:$0xf]
  %v48 = vld [vmem:[%s1 + $0x64] sm:$0xf]
  %v49 = vld [vmem:[%s1 + $0x68] sm:$0xf]
  %v50 = vld [vmem:[%s1 + $0x6c] sm:$0xf]
  %v51 = vld [vmem:[%s1 + $0x70] sm:$0xf]
  %v52 = vld [vmem:[%s1 + $0x74] sm:$0xf]
  %v53 = vld [vmem:[%s1 + $0x78] sm:$0xf]
  %v54 = vld [vmem:[%s1 + $0x7c] sm:$0xf]
  %v55 = vld [vmem:[%s1 + $0x80] sm:$0xf]
  %v56 = vld [vmem:[%s1 + $0x84] sm:$0xf]
  %v57 = vld [vmem:[%s1 + $0x88] sm:$0xf]
  %v58 = vld [vmem:[%s1 + $0x8c] sm:$0xf]
  %v59 = vld [vmem:[%s1 + $0x90] sm:$0xf]
  %v60 = vld [vmem:[%s1 + $0x94] sm:$0xf]
  %v61 = vld [vmem:[%s1 + $0x98] sm:$0xf]
  %v62 = vld [vmem:[%s1 + $0x9c] sm:$0xf]
  %v63 = vld [vmem:[%s1 + $0xa0] sm:$0xf]
  %v64 = vld [vmem:[%s1 + $0xa4] sm:$0xf]
  %v65 = vld [vmem:[%s1 + $0xa8] sm:$0xf]
  %v66 = vld [vmem:[%s1 + $0xac] sm:$0xf]
  %v67 = vld [vmem:[%s1 + $0xb0] sm:$0xf]
  %v68 = vld [vmem:[%s1 + $0xb4] sm:$0xf]
  %v69 = vld [vmem:[%s1 + $0xb8] sm:$0xf]
  %v70 = vld [vmem:[%s1 + $0xbc] sm:$0xf]
  %v71 = vld [vmem:[%s1 + $0xc0] sm:$0xf]
  %v72 = vld [vmem:[%s1 + $0xc4] sm:$0xf]
  %v73 = vld [vmem:[%s1 + $0xc8] sm:$0xf]
  %v74 = vld [vmem:[%s1 + $0xcc] sm:$0xf]
  %v75 = vld [vmem:[%s1 + $0xd0] sm:$0xf]
  %v76 = vld [vmem:[%s1 + $0xd4] sm:$0xf]
  %v77 = vld [vmem:[%s1 + $0xd8] sm:$0xf]
  %v78 = vld [vmem:[%s1 + $0xdc] sm:$0xf]
  %v79 = vld [vmem:[%s1 + $0xe0] sm:$0xf]
  %v80 = vld [vmem:[%s1 + $0xe4] sm:$0xf]
  %v81 = vld [vmem:[%s1 + $0xe8] sm:$0xf]
  %v82 = vld [vmem:[%s1 + $0xec] sm:$0xf]
  %v83 = vld [vmem:[%s1 + $0xf0] sm:$0xf]
  %v84 = vld [vmem:[%s1 + $0xf4] sm:$0xf]
  %v85 = vld [vmem:[%s1 + $0xf8] sm:$0xf]
  %v86 = vld [vmem:[%s1 + $0xfc] sm:$0xf]
  %v87 = vld [vmem:[%s2] sm:$0x1]
  %v89 = vlaneseq
  %v90 = vshrl.u32 %v89, 7
  %v91 = vsub.s32 0, %v90
  %v92 = vrot.slane %v87, %v91
  %v102 = vunpack.c.l.b16 %v15
  %v103 = vunpack.c.h.b16 %v15
  %v104 = vunpack.c.l.b16 %v16
  %v105 = vunpack.c.h.b16 %v16
  %v106 = vunpack.c.l.b16 %v17
  %v107 = vunpack.c.h.b16 %v17
  %v108 = vunpack.c.l.b16 %v18
  %v109 = vunpack.c.h.b16 %v18
  %v110 = vunpack.c.l.b16 %v19
  %v111 = vunpack.c.h.b16 %v19
  %v112 = vunpack.c.l.b16 %v20
  %v113 = vunpack.c.h.b16 %v20
  %v114 = vunpack.c.l.b16 %v21
  %v115 = vunpack.c.h.b16 %v21
  %v116 = vunpack.c.l.b16 %v22
  %v117 = vunpack.c.h.b16 %v22
  %v118 = vpack.c.b16 %v106, %v102
  %v119 = vpack.c.b16 %v107, %v103
  %v120 = vpack.c.b16 %v108, %v104
  %v121 = vpack.c.b16 %v109, %v105
  %v122 = vpack.c.b16 %v114, %v110
  %v123 = vpack.c.b16 %v115, %v111
  %v124 = vpack.c.b16 %v116, %v112
  %v125 = vpack.c.b16 %v117, %v113
  %v198 = vunpack.c.l.b16 %v23
  %v199 = vunpack.c.l.b16 %v24
  %v200 = vunpack.c.l.b16 %v25
  %v201 = vunpack.c.l.b16 %v26
  %v202 = vunpack.c.l.b16 %v27
  %v203 = vunpack.c.l.b16 %v28
  %v204 = vunpack.c.l.b16 %v29
  %v205 = vunpack.c.l.b16 %v30
  %v206 = vunpack.c.l.b16 %v31
  %v207 = vunpack.c.l.b16 %v32
  %v208 = vunpack.c.l.b16 %v33
  %v209 = vunpack.c.l.b16 %v34
  %v210 = vunpack.c.l.b16 %v35
  %v211 = vunpack.c.l.b16 %v36
  %v212 = vunpack.c.l.b16 %v37
  %v213 = vunpack.c.l.b16 %v38
  %v214 = vunpack.c.l.b16 %v39
  %v215 = vunpack.c.l.b16 %v40
  %v216 = vunpack.c.l.b16 %v41
  %v217 = vunpack.c.l.b16 %v42
  %v218 = vunpack.c.l.b16 %v43
  %v219 = vunpack.c.l.b16 %v44
  %v220 = vunpack.c.l.b16 %v45
  %v221 = vunpack.c.l.b16 %v46
  %v222 = vunpack.c.l.b16 %v47
  %v223 = vunpack.c.l.b16 %v48
  %v224 = vunpack.c.l.b16 %v49
  %v225 = vunpack.c.l.b16 %v50
  %v226 = vunpack.c.l.b16 %v51
  %v227 = vunpack.c.l.b16 %v52
  %v228 = vunpack.c.l.b16 %v53
  %v229 = vunpack.c.l.b16 %v54
  %v230 = vunpack.c.l.b16 %v55
  %v231 = vunpack.c.l.b16 %v56
  %v232 = vunpack.c.l.b16 %v57
  %v233 = vunpack.c.l.b16 %v58
  %v234 = vunpack.c.l.b16 %v59
  %v235 = vunpack.c.l.b16 %v60
  %v236 = vunpack.c.l.b16 %v61
  %v237 = vunpack.c.l.b16 %v62
  %v238 = vunpack.c.l.b16 %v63
  %v239 = vunpack.c.l.b16 %v64
  %v240 = vunpack.c.l.b16 %v65
  %v241 = vunpack.c.l.b16 %v66
  %v242 = vunpack.c.l.b16 %v67
  %v243 = vunpack.c.l.b16 %v68
  %v244 = vunpack.c.l.b16 %v69
  %v245 = vunpack.c.l.b16 %v70
  %v246 = vunpack.c.l.b16 %v71
  %v247 = vunpack.c.l.b16 %v72
  %v248 = vunpack.c.l.b16 %v73
  %v249 = vunpack.c.l.b16 %v74
  %v250 = vunpack.c.l.b16 %v75
  %v251 = vunpack.c.l.b16 %v76
  %v252 = vunpack.c.l.b16 %v77
  %v253 = vunpack.c.l.b16 %v78
  %v254 = vunpack.c.l.b16 %v79
  %v255 = vunpack.c.l.b16 %v80
  %v256 = vunpack.c.l.b16 %v81
  %v257 = vunpack.c.l.b16 %v82
  %v258 = vunpack.c.l.b16 %v83
  %v259 = vunpack.c.l.b16 %v84
  %v260 = vunpack.c.l.b16 %v85
  %v261 = vunpack.c.l.b16 %v86
  %v262 = vpack.c.b16 %v199, %v198
  %v263 = vpack.c.b16 %v201, %v200
  %v264 = vpack.c.b16 %v203, %v202
  %v265 = vpack.c.b16 %v205, %v204
  %v266 = vpack.c.b16 %v207, %v206
  %v267 = vpack.c.b16 %v209, %v208
  %v268 = vpack.c.b16 %v211, %v210
  %v269 = vpack.c.b16 %v213, %v212
  %v270 = vpack.c.b16 %v215, %v214
  %v271 = vpack.c.b16 %v217, %v216
  %v272 = vpack.c.b16 %v219, %v218
  %v273 = vpack.c.b16 %v221, %v220
  %v274 = vpack.c.b16 %v223, %v222
  %v275 = vpack.c.b16 %v225, %v224
  %v276 = vpack.c.b16 %v227, %v226
  %v277 = vpack.c.b16 %v229, %v228
  %v278 = vpack.c.b16 %v231, %v230
  %v279 = vpack.c.b16 %v233, %v232
  %v280 = vpack.c.b16 %v235, %v234
  %v281 = vpack.c.b16 %v237, %v236
  %v282 = vpack.c.b16 %v239, %v238
  %v283 = vpack.c.b16 %v241, %v240
  %v284 = vpack.c.b16 %v243, %v242
  %v285 = vpack.c.b16 %v245, %v244
  %v286 = vpack.c.b16 %v247, %v246
  %v287 = vpack.c.b16 %v249, %v248
  %v288 = vpack.c.b16 %v251, %v250
  %v289 = vpack.c.b16 %v253, %v252
  %v290 = vpack.c.b16 %v255, %v254
  %v291 = vpack.c.b16 %v257, %v256
  %v292 = vpack.c.b16 %v259, %v258
  %v293 = vpack.c.b16 %v261, %v260
  %326 = vmatprep.subr.bf16.mxu0 0
  %327 = vmatpush1.bf16.msra.mxu0 %v262
  %328 = vmatprep.subr.bf16.mxu0 0
  %329 = vmatpush1.bf16.msra.mxu0 %v263
  %330 = vmatprep.subr.bf16.mxu0 0
  %331 = vmatpush1.bf16.msra.mxu0 %v264
  %332 = vmatprep.subr.bf16.mxu0 0
  %333 = vmatpush1.bf16.msra.mxu0 %v265
  %334 = vmatprep.subr.bf16.mxu0 0
  %335 = vmatpush1.bf16.msra.mxu0 %v266
  %336 = vmatprep.subr.bf16.mxu0 0
  %337 = vmatpush1.bf16.msra.mxu0 %v267
  %338 = vmatprep.subr.bf16.mxu0 0
  %339 = vmatpush1.bf16.msra.mxu0 %v268
  %340 = vmatprep.subr.bf16.mxu0 0
  %341 = vmatpush1.bf16.msra.mxu0 %v269
  %342 = vmatprep.subr.bf16.mxu0 0
  %343 = vmatpush1.bf16.msra.mxu0 %v270
  %344 = vmatprep.subr.bf16.mxu0 0
  %345 = vmatpush1.bf16.msra.mxu0 %v271
  %346 = vmatprep.subr.bf16.mxu0 0
  %347 = vmatpush1.bf16.msra.mxu0 %v272
  %348 = vmatprep.subr.bf16.mxu0 0
  %349 = vmatpush1.bf16.msra.mxu0 %v273
  %350 = vmatprep.subr.bf16.mxu0 0
  %351 = vmatpush1.bf16.msra.mxu0 %v274
  %352 = vmatprep.subr.bf16.mxu0 0
  %353 = vmatpush1.bf16.msra.mxu0 %v275
  %354 = vmatprep.subr.bf16.mxu0 0
  %355 = vmatpush1.bf16.msra.mxu0 %v276
  %356 = vmatprep.subr.bf16.mxu0 0
  %357 = vmatpush1.bf16.msra.mxu0 %v277
  %358 = vmatprep.mubr.bf16.mxu0 %v119
  %359 = vmatmul.mubr.bf16.gmra.mrb[0].mxu0 %v118
  %v360 = vpop.f32.mrb[0].mxu0
  %v361 = vadd.f32 %v92, %v360
  %v362 = vpop.f32.mrb[0].mxu0
  %v363 = vpop.f32.mrb[0].mxu0
  %v364 = vadd.f32 %v92, %v363
  %v365 = vpop.f32.mrb[0].mxu0
  %366 = vmatprep.mubr.bf16.mxu0 %v123
  %367 = vmatmul.mubr.bf16.gmra.mrb[0].mxu0 %v122
  %v368 = vpop.f32.mrb[0].mxu0
  %v369 = vadd.f32 %v92, %v368
  %v370 = vpop.f32.mrb[0].mxu0
  %v371 = vpop.f32.mrb[0].mxu0
  %v372 = vadd.f32 %v92, %v371
  %v373 = vpop.f32.mrb[0].mxu0
  %374 = vdwg.mxu0
  %375 = vmatprep.subr.bf16.mxu0 0
  %376 = vmatpush1.bf16.msra.mxu0 %v278
  %377 = vmatprep.subr.bf16.mxu0 0
  %378 = vmatpush1.bf16.msra.mxu0 %v279
  %379 = vmatprep.subr.bf16.mxu0 0
  %380 = vmatpush1.bf16.msra.mxu0 %v280
  %381 = vmatprep.subr.bf16.mxu0 0
  %382 = vmatpush1.bf16.msra.mxu0 %v281
  %383 = vmatprep.subr.bf16.mxu0 0
  %384 = vmatpush1.bf16.msra.mxu0 %v282
  %385 = vmatprep.subr.bf16.mxu0 0
  %386 = vmatpush1.bf16.msra.mxu0 %v283
  %387 = vmatprep.subr.bf16.mxu0 0
  %388 = vmatpush1.bf16.msra.mxu0 %v284
  %389 = vmatprep.subr.bf16.mxu0 0
  %390 = vmatpush1.bf16.msra.mxu0 %v285
  %391 = vmatprep.subr.bf16.mxu0 0
  %392 = vmatpush1.bf16.msra.mxu0 %v286
  %393 = vmatprep.subr.bf16.mxu0 0
  %394 = vmatpush1.bf16.msra.mxu0 %v287
  %395 = vmatprep.subr.bf16.mxu0 0
  %396 = vmatpush1.bf16.msra.mxu0 %v288
  %397 = vmatprep.subr.bf16.mxu0 0
  %398 = vmatpush1.bf16.msra.mxu0 %v289
  %399 = vmatprep.subr.bf16.mxu0 0
  %400 = vmatpush1.bf16.msra.mxu0 %v290
  %401 = vmatprep.subr.bf16.mxu0 0
  %402 = vmatpush1.bf16.msra.mxu0 %v291
  %403 = vmatprep.subr.bf16.mxu0 0
  %404 = vmatpush1.bf16.msra.mxu0 %v292
  %405 = vmatprep.subr.bf16.mxu0 0
  %406 = vmatpush1.bf16.msra.mxu0 %v293
  %407 = vmatprep.mubr.bf16.mxu0 %v121
  %408 = vmatmul.mubr.bf16.gmra.mrb[0].mxu0 %v120
  %v409 = vpop.f32.mrb[0].mxu0
  %v410 = vadd.f32 %v361, %v409
  %v411 = vpop.f32.mrb[0].mxu0
  %v412 = vpop.f32.mrb[0].mxu0
  %v413 = vadd.f32 %v364, %v412
  %v414 = vpop.f32.mrb[0].mxu0
  %415 = vmatprep.mubr.bf16.mxu0 %v125
  %416 = vmatmul.mubr.bf16.gmra.mrb[0].mxu0 %v124
  %v417 = vpop.f32.mrb[0].mxu0
  %v418 = vadd.f32 %v369, %v417
  %v419 = vpop.f32.mrb[0].mxu0
  %v420 = vpop.f32.mrb[0].mxu0
  %v421 = vadd.f32 %v372, %v420
  %v422 = vpop.f32.mrb[0].mxu0
  %423 = vdwg.mxu0
  %v424 = vmax.f32 %v410, 0.0
  %v425 = vmax.f32 %v413, 0.0
  %v426 = vmax.f32 %v418, 0.0
  %v427 = vmax.f32 %v421, 0.0
  %v428 = vpack.c.bf16 %v425, %v424
  %v429 = vpack.c.bf16 %v427, %v426
  %v432 = vunpack.c.l.b16 %v428
  %v433 = vunpack.c.h.b16 %v428
  %v434 = vunpack.c.l.b16 %v429
  %v435 = vunpack.c.h.b16 %v429
  %v436 = vpack.c.b16 %v432, %v432
  %v437 = vpack.c.b16 %v433, %v433
  %v438 = vpack.c.b16 %v434, %v434
  %v439 = vpack.c.b16 %v435, %v435
  %444 = vst [vmem:[%s3] sm:$0xf] %v436
  %445 = vst [vmem:[%s3 + $0x4] sm:$0xf] %v437
  %446 = vst [vmem:[%s3 + $0x8] sm:$0xf] %v438
  %447 = vst [vmem:[%s3 + $0xc] sm:$0xf] %v439
  // Predicated region
  $region14: #{ddpg_actor_forward.5} parent=0 // pred_check
    _
  $region15: #{ddpg_actor_forward.5} parent=0 // pred_check_branch
    %449 = sbr.rel (0) target = $region17
  $region16: #{ddpg_actor_forward.5} parent=0 // pred_region
    _
  $region17: #{ddpg_actor_forward.5} parent=0 // pred_fallthru
    _
  // Predicated region
  $region18: #{ddpg_actor_forward.5} parent=0 // pred_check
    _
  $region19: #{ddpg_actor_forward.5} parent=0 // pred_check_branch
    %451 = sbr.rel (0) target = $region21
  $region20: #{ddpg_actor_forward.5} parent=0 // pred_region
    _
  $region21: #{ddpg_actor_forward.5} parent=0 // pred_fallthru
    _

// kernel: ddpg_actor_forward.6
$region0: #{ddpg_actor_forward.6}
  #allocation0 [shape = 'u32[]', space=smem, size = 0x4, offset = 0x4, fixed_abs, tag = 'smem constant byte address 0x4 - core index']
  #allocation1 [shape = 'u32[144,128]{1,0:T(1,128)}', space=vmem, size = 0x12000, scoped, tag = 'internal scratch']
  %s0 = inlined_call_operand.vmem [shape: bf16[32,576], index: 0, kind: input, shape index: {}]
  %s1 = inlined_call_operand.vmem [shape: bf16[576,128], index: 1, kind: input, shape index: {}]
  %s2 = inlined_call_operand.vmem [shape: f32[1,128], index: 2, kind: input, shape index: {}]
  %s3 = inlined_call_operand.vmem [shape: bf16[32,128], index: 3, kind: output, shape index: {}]
  %s4 = sld [smem:[#allocation0]]
  $region22: #{ddpg_actor_forward.6} parent=0
    _
  %s6 = ssub.s32 1, %s4
  %s7 = scalar_select 0, %s6, %s4
  // Predicated region
  $region2: #{ddpg_actor_forward.6} parent=0 // pred_check
    _
  $region3: #{ddpg_actor_forward.6} parent=0 // pred_check_branch
    %9 = sbr.rel (0) target = $region5
  $region4: #{ddpg_actor_forward.6} parent=0 // pred_region
    _
  $region5: #{ddpg_actor_forward.6} parent=0 // pred_fallthru
    _
  // Predicated region
  $region6: #{ddpg_actor_forward.6} parent=0 // pred_check
    _
  $region7: #{ddpg_actor_forward.6} parent=0 // pred_check_branch
    %11 = sbr.rel (0) target = $region9
  $region8: #{ddpg_actor_forward.6} parent=0 // pred_region
    _
  $region9: #{ddpg_actor_forward.6} parent=0 // pred_fallthru
    _
  // Predicated region
  $region10: #{ddpg_actor_forward.6} parent=0 // pred_check
    _
  $region11: #{ddpg_actor_forward.6} parent=0 // pred_check_branch
    %13 = sbr.rel (0) target = $region13
  $region12: #{ddpg_actor_forward.6} parent=0 // pred_region
    _
  $region13: #{ddpg_actor_forward.6} parent=0 // pred_fallthru
    _
  %v15 = vld [vmem:[%s0] sm:$0xff]
  %v16 = vld [vmem:[%s0 + $0x8] sm:$0xff]
  %v17 = vld [vmem:[%s0 + $0x10] sm:$0xf]
  %v18 = vld [vmem:[%s0 + $0x14] sm:$0xff]
  %v19 = vld [vmem:[%s0 + $0x1c] sm:$0xff]
  %v20 = vld [vmem:[%s0 + $0x24] sm:$0xf]
  %v21 = vld [vmem:[%s0 + $0x28] sm:$0xff]
  %v22 = vld [vmem:[%s0 + $0x30] sm:$0xff]
  %v23 = vld [vmem:[%s0 + $0x38] sm:$0xf]
  %v24 = vld [vmem:[%s0 + $0x3c] sm:$0xff]
  %v25 = vld [vmem:[%s0 + $0x44] sm:$0xff]
  %v26 = vld [vmem:[%s0 + $0x4c] sm:$0xf]
  %v27 = vld [vmem:[%s1] sm:$0xf]
  %v28 = vld [vmem:[%s1 + $0x4] sm:$0xf]
  %v29 = vld [vmem:[%s1 + $0x8] sm:$0xf]
  %v30 = vld [vmem:[%s1 + $0xc] sm:$0xf]
  %v31 = vld [vmem:[%s1 + $0x10] sm:$0xf]
  %v32 = vld [vmem:[%s1 + $0x14] sm:$0xf]
  %v33 = vld [vmem:[%s1 + $0x18] sm:$0xf]
  %v34 = vld [vmem:[%s1 + $0x1c] sm:$0xf]
  %v35 = vld [vmem:[%s1 + $0x20] sm:$0xf]
  %v36 = vld [vmem:[%s1 + $0x24] sm:$0xf]
  %v37 = vld [vmem:[%s1 + $0x28] sm:$0xf]
  %v38 = vld [vmem:[%s1 + $0x2c] sm:$0xf]
  %v39 = vld [vmem:[%s1 + $0x30] sm:$0xf]
  %v40 = vld [vmem:[%s1 + $0x34] sm:$0xf]
  %v41 = vld [vmem:[%s1 + $0x38] sm:$0xf]
  %v42 = vld [vmem:[%s1 + $0x3c] sm:$0xf]
  %v43 = vld [vmem:[%s1 + $0x40] sm:$0xf]
  %v44 = vld [vmem:[%s1 + $0x44] sm:$0xf]
  %v45 = vld [vmem:[%s1 + $0x48] sm:$0xf]
  %v46 = vld [vmem:[%s1 + $0x4c] sm:$0xf]
  %v47 = vld [vmem:[%s1 + $0x50] sm:$0xf]
  %v48 = vld [vmem:[%s1 + $0x54] sm:$0xf]
  %v49 = vld [vmem:[%s1 + $0x58] sm:$0xf]
  %v50 = vld [vmem:[%s1 + $0x5c] sm:$0xf]
  %v51 = vld [vmem:[%s1 + $0x60] sm:$0xf]
  %v52 = vld [vmem:[%s1 + $0x64] sm:$0xf]
  %v53 = vld [vmem:[%s1 + $0x68] sm:$0xf]
  %v54 = vld [vmem:[%s1 + $0x6c] sm:$0xf]
  %v55 = vld [vmem:[%s1 + $0x70] sm:$0xf]
  %v56 = vld [vmem:[%s1 + $0x74] sm:$0xf]
  %v57 = vld [vmem:[%s1 + $0x78] sm:$0xf]
  %v58 = vld [vmem:[%s1 + $0x7c] sm:$0xf]
  %v59 = vld [vmem:[%s1 + $0x80] sm:$0xf]
  %v60 = vld [vmem:[%s1 + $0x84] sm:$0xf]
  %v61 = vld [vmem:[%s1 + $0x88] sm:$0xf]
  %v62 = vld [vmem:[%s1 + $0x8c] sm:$0xf]
  %v63 = vld [vmem:[%s1 + $0x90] sm:$0xf]
  %v64 = vld [vmem:[%s1 + $0x94] sm:$0xf]
  %v65 = vld [vmem:[%s1 + $0x98] sm:$0xf]
  %v66 = vld [vmem:[%s1 + $0x9c] sm:$0xf]
  %v67 = vld [vmem:[%s1 + $0xa0] sm:$0xf]
  %v68 = vld [vmem:[%s1 + $0xa4] sm:$0xf]
  %v69 = vld [vmem:[%s1 + $0xa8] sm:$0xf]
  %v70 = vld [vmem:[%s1 + $0xac] sm:$0xf]
  %v71 = vld [vmem:[%s1 + $0xb0] sm:$0xf]
  %v72 = vld [vmem:[%s1 + $0xb4] sm:$0xf]
  %v73 = vld [vmem:[%s1 + $0xb8] sm:$0xf]
  %v74 = vld [vmem:[%s1 + $0xbc] sm:$0xf]
  %v75 = vld [vmem:[%s1 + $0xc0] sm:$0xf]
  %v76 = vld [vmem:[%s1 + $0xc4] sm:$0xf]
  %v77 = vld [vmem:[%s1 + $0xc8] sm:$0xf]
  %v78 = vld [vmem:[%s1 + $0xcc] sm:$0xf]
  %v79 = vld [vmem:[%s1 + $0xd0] sm:$0xf]
  %v80 = vld [vmem:[%s1 + $0xd4] sm:$0xf]
  %v81 = vld [vmem:[%s1 + $0xd8] sm:$0xf]
  %v82 = vld [vmem:[%s1 + $0xdc] sm:$0xf]
  %v83 = vld [vmem:[%s1 + $0xe0] sm:$0xf]
  %v84 = vld [vmem:[%s1 + $0xe4] sm:$0xf]
  %v85 = vld [vmem:[%s1 + $0xe8] sm:$0xf]
  %v86 = vld [vmem:[%s1 + $0xec] sm:$0xf]
  %v87 = vld [vmem:[%s1 + $0xf0] sm:$0xf]
  %v88 = vld [vmem:[%s1 + $0xf4] sm:$0xf]
  %v89 = vld [vmem:[%s1 + $0xf8] sm:$0xf]
  %v90 = vld [vmem:[%s1 + $0xfc] sm:$0xf]
  %v91 = vld [vmem:[%s1 + $0x100] sm:$0xf]
  %v92 = vld [vmem:[%s1 + $0x104] sm:$0xf]
  %v93 = vld [vmem:[%s1 + $0x108] sm:$0xf]
  %v94 = vld [vmem:[%s1 + $0x10c] sm:$0xf]
  %v95 = vld [vmem:[%s1 + $0x110] sm:$0xf]
  %v96 = vld [vmem:[%s1 + $0x114] sm:$0xf]
  %v97 = vld [vmem:[%s1 + $0x118] sm:$0xf]
  %v98 = vld [vmem:[%s1 + $0x11c] sm:$0xf]
  %v99 = vld [vmem:[%s2] sm:$0x1]
  %v101 = vlaneseq
  %v102 = vshrl.u32 %v101, 7
  %v103 = vsub.s32 0, %v102
  %v104 = vrot.slane %v99, %v103
  %v118 = vunpack.c.l.b16 %v15
  %v119 = vunpack.c.h.b16 %v15
  %v120 = vunpack.c.l.b16 %v16
  %v121 = vunpack.c.h.b16 %v16
  %v122 = vunpack.c.l.b16 %v17
  %v123 = vunpack.c.l.b16 %v18
  %v124 = vunpack.c.h.b16 %v18
  %v125 = vunpack.c.l.b16 %v19
  %v126 = vunpack.c.h.b16 %v19
  %v127 = vunpack.c.l.b16 %v20
  %v128 = vunpack.c.l.b16 %v21
  %v129 = vunpack.c.h.b16 %v21
  %v130 = vunpack.c.l.b16 %v22
  %v131 = vunpack.c.h.b16 %v22
  %v132 = vunpack.c.l.b16 %v23
  %v133 = vunpack.c.l.b16 %v24
  %v134 = vunpack.c.h.b16 %v24
  %v135 = vunpack.c.l.b16 %v25
  %v136 = vunpack.c.h.b16 %v25
  %v137 = vunpack.c.l.b16 %v26
  %v138 = vpack.c.b16 %v123, %v118
  %v139 = vpack.c.b16 %v124, %v119
  %v140 = vpack.c.b16 %v125, %v120
  %v141 = vpack.c.b16 %v126, %v121
  %v142 = vpack.c.b16 %v127, %v122
  %v143 = vpack.c.b16 %v133, %v128
  %v144 = vpack.c.b16 %v134, %v129
  %v145 = vpack.c.b16 %v135, %v130
  %v146 = vpack.c.b16 %v136, %v131
  %v147 = vpack.c.b16 %v137, %v132
  %v228 = vunpack.c.l.b16 %v27
  %v229 = vunpack.c.l.b16 %v28
  %v230 = vunpack.c.l.b16 %v29
  %v231 = vunpack.c.l.b16 %v30
  %v232 = vunpack.c.l.b16 %v31
  %v233 = vunpack.c.l.b16 %v32
  %v234 = vunpack.c.l.b16 %v33
  %v235 = vunpack.c.l.b16 %v34
  %v236 = vunpack.c.l.b16 %v35
  %v237 = vunpack.c.l.b16 %v36
  %v238 = vunpack.c.l.b16 %v37
  %v239 = vunpack.c.l.b16 %v38
  %v240 = vunpack.c.l.b16 %v39
  %v241 = vunpack.c.l.b16 %v40
  %v242 = vunpack.c.l.b16 %v41
  %v243 = vunpack.c.l.b16 %v42
  %v244 = vunpack.c.l.b16 %v43
  %v245 = vunpack.c.l.b16 %v44
  %v246 = vunpack.c.l.b16 %v45
  %v247 = vunpack.c.l.b16 %v46
  %v248 = vunpack.c.l.b16 %v47
  %v249 = vunpack.c.l.b16 %v48
  %v250 = vunpack.c.l.b16 %v49
  %v251 = vunpack.c.l.b16 %v50
  %v252 = vunpack.c.l.b16 %v51
  %v253 = vunpack.c.l.b16 %v52
  %v254 = vunpack.c.l.b16 %v53
  %v255 = vunpack.c.l.b16 %v54
  %v256 = vunpack.c.l.b16 %v55
  %v257 = vunpack.c.l.b16 %v56
  %v258 = vunpack.c.l.b16 %v57
  %v259 = vunpack.c.l.b16 %v58
  %v260 = vunpack.c.l.b16 %v59
  %v261 = vunpack.c.l.b16 %v60
  %v262 = vunpack.c.l.b16 %v61
  %v263 = vunpack.c.l.b16 %v62
  %v264 = vunpack.c.l.b16 %v63
  %v265 = vunpack.c.l.b16 %v64
  %v266 = vunpack.c.l.b16 %v65
  %v267 = vunpack.c.l.b16 %v66
  %v268 = vunpack.c.l.b16 %v67
  %v269 = vunpack.c.l.b16 %v68
  %v270 = vunpack.c.l.b16 %v69
  %v271 = vunpack.c.l.b16 %v70
  %v272 = vunpack.c.l.b16 %v71
  %v273 = vunpack.c.l.b16 %v72
  %v274 = vunpack.c.l.b16 %v73
  %v275 = vunpack.c.l.b16 %v74
  %v276 = vunpack.c.l.b16 %v75
  %v277 = vunpack.c.l.b16 %v76
  %v278 = vunpack.c.l.b16 %v77
  %v279 = vunpack.c.l.b16 %v78
  %v280 = vunpack.c.l.b16 %v79
  %v281 = vunpack.c.l.b16 %v80
  %v282 = vunpack.c.l.b16 %v81
  %v283 = vunpack.c.l.b16 %v82
  %v284 = vunpack.c.l.b16 %v83
  %v285 = vunpack.c.l.b16 %v84
  %v286 = vunpack.c.l.b16 %v85
  %v287 = vunpack.c.l.b16 %v86
  %v288 = vunpack.c.l.b16 %v87
  %v289 = vunpack.c.l.b16 %v88
  %v290 = vunpack.c.l.b16 %v89
  %v291 = vunpack.c.l.b16 %v90
  %v292 = vunpack.c.l.b16 %v91
  %v293 = vunpack.c.l.b16 %v92
  %v294 = vunpack.c.l.b16 %v93
  %v295 = vunpack.c.l.b16 %v94
  %v296 = vunpack.c.l.b16 %v95
  %v297 = vunpack.c.l.b16 %v96
  %v298 = vunpack.c.l.b16 %v97
  %v299 = vunpack.c.l.b16 %v98
  %v300 = vpack.c.b16 %v229, %v228
  %v301 = vpack.c.b16 %v231, %v230
  %v302 = vpack.c.b16 %v233, %v232
  %v303 = vpack.c.b16 %v235, %v234
  %v304 = vpack.c.b16 %v237, %v236
  %v305 = vpack.c.b16 %v239, %v238
  %v306 = vpack.c.b16 %v241, %v240
  %v307 = vpack.c.b16 %v243, %v242
  %v308 = vpack.c.b16 %v245, %v244
  %v309 = vpack.c.b16 %v247, %v246
  %v310 = vpack.c.b16 %v249, %v248
  %v311 = vpack.c.b16 %v251, %v250
  %v312 = vpack.c.b16 %v253, %v252
  %v313 = vpack.c.b16 %v255, %v254
  %v314 = vpack.c.b16 %v257, %v256
  %v315 = vpack.c.b16 %v259, %v258
  %v316 = vpack.c.b16 %v261, %v260
  %v317 = vpack.c.b16 %v263, %v262
  %v318 = vpack.c.b16 %v265, %v264
  %v319 = vpack.c.b16 %v267, %v266
  %v320 = vpack.c.b16 %v269, %v268
  %v321 = vpack.c.b16 %v271, %v270
  %v322 = vpack.c.b16 %v273, %v272
  %v323 = vpack.c.b16 %v275, %v274
  %v324 = vpack.c.b16 %v277, %v276
  %v325 = vpack.c.b16 %v279, %v278
  %v326 = vpack.c.b16 %v281, %v280
  %v327 = vpack.c.b16 %v283, %v282
  %v328 = vpack.c.b16 %v285, %v284
  %v329 = vpack.c.b16 %v287, %v286
  %v330 = vpack.c.b16 %v289, %v288
  %v331 = vpack.c.b16 %v291, %v290
  %v332 = vpack.c.b16 %v293, %v292
  %v333 = vpack.c.b16 %v295, %v294
  %v334 = vpack.c.b16 %v297, %v296
  %v335 = vpack.c.b16 %v299, %v298
  %vm372 = vcmask 523264
  %v374 = vsel %vm372, %v142, 0
  %v377 = vsel %vm372, %v147, 0
  %379 = vmatprep.subr.bf16.mxu0 0
  %380 = vmatpush1.bf16.msra.mxu0 %v300
  %381 = vmatprep.subr.bf16.mxu0 0
  %382 = vmatpush1.bf16.msra.mxu0 %v301
  %383 = vmatprep.subr.bf16.mxu0 0
  %384 = vmatpush1.bf16.msra.mxu0 %v302
  %385 = vmatprep.subr.bf16.mxu0 0
  %386 = vmatpush1.bf16.msra.mxu0 %v303
  %387 = vmatprep.subr.bf16.mxu0 0
  %388 = vmatpush1.bf16.msra.mxu0 %v304
  %389 = vmatprep.subr.bf16.mxu0 0
  %390 = vmatpush1.bf16.msra.mxu0 %v305
  %391 = vmatprep.subr.bf16.mxu0 0
  %392 = vmatpush1.bf16.msra.mxu0 %v306
  %393 = vmatprep.subr.bf16.mxu0 0
  %394 = vmatpush1.bf16.msra.mxu0 %v307
  %395 = vmatprep.subr.bf16.mxu0 0
  %396 = vmatpush1.bf16.msra.mxu0 %v308
  %397 = vmatprep.subr.bf16.mxu0 0
  %398 = vmatpush1.bf16.msra.mxu0 %v309
  %399 = vmatprep.subr.bf16.mxu0 0
  %400 = vmatpush1.bf16.msra.mxu0 %v310
  %401 = vmatprep.subr.bf16.mxu0 0
  %402 = vmatpush1.bf16.msra.mxu0 %v311
  %403 = vmatprep.subr.bf16.mxu0 0
  %404 = vmatpush1.bf16.msra.mxu0 %v312
  %405 = vmatprep.subr.bf16.mxu0 0
  %406 = vmatpush1.bf16.msra.mxu0 %v313
  %407 = vmatprep.subr.bf16.mxu0 0
  %408 = vmatpush1.bf16.msra.mxu0 %v314
  %409 = vmatprep.subr.bf16.mxu0 0
  %410 = vmatpush1.bf16.msra.mxu0 %v315
  %411 = vmatprep.mubr.bf16.mxu0 %v139
  %412 = vmatmul.mubr.bf16.gmra.mrb[0].mxu0 %v138
  %v413 = vpop.f32.mrb[0].mxu0
  %v414 = vadd.f32 %v104, %v413
  %v415 = vpop.f32.mrb[0].mxu0
  %v416 = vpop.f32.mrb[0].mxu0
  %v417 = vadd.f32 %v104, %v416
  %v418 = vpop.f32.mrb[0].mxu0
  %419 = vmatprep.mubr.bf16.mxu0 %v144
  %420 = vmatmul.mubr.bf16.gmra.mrb[0].mxu0 %v143
  %v421 = vpop.f32.mrb[0].mxu0
  %v422 = vadd.f32 %v104, %v421
  %v423 = vpop.f32.mrb[0].mxu0
  %v424 = vpop.f32.mrb[0].mxu0
  %v425 = vadd.f32 %v104, %v424
  %v426 = vpop.f32.mrb[0].mxu0
  %427 = vdwg.mxu0
  %428 = vmatprep.subr.bf16.mxu0 0
  %429 = vmatpush1.bf16.msra.mxu0 %v316
  %430 = vmatprep.subr.bf16.mxu0 0
  %431 = vmatpush1.bf16.msra.mxu0 %v317
  %432 = vmatprep.subr.bf16.mxu0 0
  %433 = vmatpush1.bf16.msra.mxu0 %v318
  %434 = vmatprep.subr.bf16.mxu0 0
  %435 = vmatpush1.bf16.msra.mxu0 %v319
  %436 = vmatprep.subr.bf16.mxu0 0
  %437 = vmatpush1.bf16.msra.mxu0 %v320
  %438 = vmatprep.subr.bf16.mxu0 0
  %439 = vmatpush1.bf16.msra.mxu0 %v321
  %440 = vmatprep.subr.bf16.mxu0 0
  %441 = vmatpush1.bf16.msra.mxu0 %v322
  %442 = vmatprep.subr.bf16.mxu0 0
  %443 = vmatpush1.bf16.msra.mxu0 %v323
  %444 = vmatprep.subr.bf16.mxu0 0
  %445 = vmatpush1.bf16.msra.mxu0 %v324
  %446 = vmatprep.subr.bf16.mxu0 0
  %447 = vmatpush1.bf16.msra.mxu0 %v325
  %448 = vmatprep.subr.bf16.mxu0 0
  %449 = vmatpush1.bf16.msra.mxu0 %v326
  %450 = vmatprep.subr.bf16.mxu0 0
  %451 = vmatpush1.bf16.msra.mxu0 %v327
  %452 = vmatprep.subr.bf16.mxu0 0
  %453 = vmatpush1.bf16.msra.mxu0 %v328
  %454 = vmatprep.subr.bf16.mxu0 0
  %455 = vmatpush1.bf16.msra.mxu0 %v329
  %456 = vmatprep.subr.bf16.mxu0 0
  %457 = vmatpush1.bf16.msra.mxu0 %v330
  %458 = vmatprep.subr.bf16.mxu0 0
  %459 = vmatpush1.bf16.msra.mxu0 %v331
  %460 = vmatprep.mubr.bf16.mxu0 %v141
  %461 = vmatmul.mubr.bf16.gmra.mrb[0].mxu0 %v140
  %v462 = vpop.f32.mrb[0].mxu0
  %v463 = vadd.f32 %v414, %v462
  %v464 = vpop.f32.mrb[0].mxu0
  %v465 = vpop.f32.mrb[0].mxu0
  %v466 = vadd.f32 %v417, %v465
  %v467 = vpop.f32.mrb[0].mxu0
  %468 = vmatprep.mubr.bf16.mxu0 %v146
  %469 = vmatmul.mubr.bf16.gmra.mrb[0].mxu0 %v145
  %v470 = vpop.f32.mrb[0].mxu0
  %v471 = vadd.f32 %v422, %v470
  %v472 = vpop.f32.mrb[0].mxu0
  %v473 = vpop.f32.mrb[0].mxu0
  %v474 = vadd.f32 %v425, %v473
  %v475 = vpop.f32.mrb[0].mxu0
  %476 = vdwg.mxu0
  %477 = vmatprep.subr.bf16.mxu0 0
  %478 = vmatpush1.bf16.msra.mxu0 %v332
  %479 = vmatprep.subr.bf16.mxu0 0
  %480 = vmatpush1.bf16.msra.mxu0 %v333
  %481 = vmatprep.subr.bf16.mxu0 0
  %482 = vmatpush1.bf16.msra.mxu0 %v334
  %483 = vmatprep.subr.bf16.mxu0 0
  %484 = vmatpush1.bf16.msra.mxu0 %v335
  %485 = vmatprep.subr.bf16.mxu0 0
  %486 = vmatpush1.bf16.msra.mxu0 0
  %487 = vmatprep.subr.bf16.mxu0 0
  %488 = vmatpush1.bf16.msra.mxu0 0
  %489 = vmatprep.subr.bf16.mxu0 0
  %490 = vmatpush1.bf16.msra.mxu0 0
  %491 = vmatprep.subr.bf16.mxu0 0
  %492 = vmatpush1.bf16.msra.mxu0 0
  %493 = vmatprep.subr.bf16.mxu0 0
  %494 = vmatpush1.bf16.msra.mxu0 0
  %495 = vmatprep.subr.bf16.mxu0 0
  %496 = vmatpush1.bf16.msra.mxu0 0
  %497 = vmatprep.subr.bf16.mxu0 0
  %498 = vmatpush1.bf16.msra.mxu0 0
  %499 = vmatprep.subr.bf16.mxu0 0
  %500 = vmatpush1.bf16.msra.mxu0 0
  %501 = vmatprep.subr.bf16.mxu0 0
  %502 = vmatpush1.bf16.msra.mxu0 0
  %503 = vmatprep.subr.bf16.mxu0 0
  %504 = vmatpush1.bf16.msra.mxu0 0
  %505 = vmatprep.subr.bf16.mxu0 0
  %506 = vmatpush1.bf16.msra.mxu0 0
  %507 = vmatprep.subr.bf16.mxu0 0
  %508 = vmatpush1.bf16.msra.mxu0 0
  %509 = vmatprep.mubr.bf16.mxu0 0
  %510 = vmatmul.mubr.bf16.gmra.mrb[0].mxu0 %v374
  %v511 = vpop.f32.mrb[0].mxu0
  %v512 = vadd.f32 %v463, %v511
  %v513 = vpop.f32.mrb[0].mxu0
  %v514 = vpop.f32.mrb[0].mxu0
  %v515 = vadd.f32 %v466, %v514
  %v516 = vpop.f32.mrb[0].mxu0
  %517 = vmatprep.mubr.bf16.mxu0 0
  %518 = vmatmul.mubr.bf16.gmra.mrb[0].mxu0 %v377
  %v519 = vpop.f32.mrb[0].mxu0
  %v520 = vadd.f32 %v471, %v519
  %v521 = vpop.f32.mrb[0].mxu0
  %v522 = vpop.f32.mrb[0].mxu0
  %v523 = vadd.f32 %v474, %v522
  %v524 = vpop.f32.mrb[0].mxu0
  %525 = vdwg.mxu0
  %v526 = vmax.f32 %v512, 0.0
  %v527 = vmax.f32 %v515, 0.0
  %v528 = vmax.f32 %v520, 0.0
  %v529 = vmax.f32 %v523, 0.0
  %v530 = vpack.c.bf16 %v527, %v526
  %v531 = vpack.c.bf16 %v529, %v528
  %v534 = vunpack.c.l.b16 %v530
  %v535 = vunpack.c.h.b16 %v530
  %v536 = vunpack.c.l.b16 %v531
  %v537 = vunpack.c.h.b16 %v531
  %v538 = vpack.c.b16 %v534, %v534
  %v539 = vpack.c.b16 %v535, %v535
  %v540 = vpack.c.b16 %v536, %v536
  %v541 = vpack.c.b16 %v537, %v537
  %546 = vst [vmem:[%s3] sm:$0xf] %v538
  %547 = vst [vmem:[%s3 + $0x4] sm:$0xf] %v539
  %548 = vst [vmem:[%s3 + $0x8] sm:$0xf] %v540
  %549 = vst [vmem:[%s3 + $0xc] sm:$0xf] %v541
  // Predicated region
  $region14: #{ddpg_actor_forward.6} parent=0 // pred_check
    _
  $region15: #{ddpg_actor_forward.6} parent=0 // pred_check_branch
    %551 = sbr.rel (0) target = $region17
  $region16: #{ddpg_actor_forward.6} parent=0 // pred_region
    _
  $region17: #{ddpg_actor_forward.6} parent=0 // pred_fallthru
    _
  // Predicated region
  $region18: #{ddpg_actor_forward.6} parent=0 // pred_check
    _
  $region19: #{ddpg_actor_forward.6} parent=0 // pred_check_branch
    %553 = sbr.rel (0) target = $region21
  $region20: #{ddpg_actor_forward.6} parent=0 // pred_region
    _
  $region21: #{ddpg_actor_forward.6} parent=0 // pred_fallthru
    _

// kernel: ddpg_actor_forward.7
$region0: #{ddpg_actor_forward.7}
  #allocation0 [shape = 'u32[]', space=smem, size = 0x4, offset = 0x4, fixed_abs, tag = 'smem constant byte address 0x4 - core index']
  #allocation1 [shape = 'u32[144,128]{1,0:T(1,128)}', space=vmem, size = 0x12000, scoped, tag = 'internal scratch']
  %s0 = inlined_call_operand.vmem [shape: bf16[2,64], index: 0, kind: input, shape index: {}]
  %s1 = inlined_call_operand.vmem [shape: bf16[64,512], index: 1, kind: input, shape index: {}]
  %s2 = inlined_call_operand.vmem [shape: f32[1,512], index: 2, kind: input, shape index: {}]
  %s3 = inlined_call_operand.vmem [shape: bf16[512,128], index: 3, kind: input, shape index: {}]
  %s4 = inlined_call_operand.vmem [shape: f32[1,128], index: 4, kind: input, shape index: {}]
  %s5 = inlined_call_operand.hbm [shape: f32[2,128], index: 5, kind: output, shape index: {}]
  %s6 = sld [smem:[#allocation0]]
  $region30: #{ddpg_actor_forward.7} parent=0
    _
  %s8 = ssub.s32 1, %s6
  %s9 = scalar_select 0, %s8, %s6
  $region1: #{ddpg_actor_forward.7} parent=0
    #allocation2 [shape = 'u8[1024]{0}', space=vmem, size = 0x400, scoped, tag = 'output window, operand 0, single buffered']
    #allocation3 [shape = 's32[1]{0}', space=sflag, size = 0x4, scoped, tag = 'scoped memory for ddpg_actor_forward.7']
    %10 = vsyncpa [#allocation3], 0
    // Predicated region
    $region2: #{ddpg_actor_forward.7} parent=1 // pred_check
      _
    $region3: #{ddpg_actor_forward.7} parent=1 // pred_check_branch
      %12 = sbr.rel (0) target = $region5
    $region4: #{ddpg_actor_forward.7} parent=1 // pred_region
      _
    $region5: #{ddpg_actor_forward.7} parent=1 // pred_fallthru
      _
    // Predicated region
    $region6: #{ddpg_actor_forward.7} parent=1 // pred_check
      _
    $region7: #{ddpg_actor_forward.7} parent=1 // pred_check_branch
      %14 = sbr.rel (0) target = $region9
    $region8: #{ddpg_actor_forward.7} parent=1 // pred_region
      _
    $region9: #{ddpg_actor_forward.7} parent=1 // pred_fallthru
      _
    // Predicated region
    $region10: #{ddpg_actor_forward.7} parent=1 // pred_check
      _
    $region11: #{ddpg_actor_forward.7} parent=1 // pred_check_branch
      %16 = sbr.rel (0) target = $region13
    $region12: #{ddpg_actor_forward.7} parent=1 // pred_region
      _
    $region13: #{ddpg_actor_forward.7} parent=1 // pred_fallthru
      _
    // Predicated region
    $region14: #{ddpg_actor_forward.7} parent=1 // pred_check
      _
    $region15: #{ddpg_actor_forward.7} parent=1 // pred_check_branch
      %18 = sbr.rel (0) target = $region17
    $region16: #{ddpg_actor_forward.7} parent=1 // pred_region
      _
    $region17: #{ddpg_actor_forward.7} parent=1 // pred_fallthru
      _
    // Predicated region
    $region18: #{ddpg_actor_forward.7} parent=1 // pred_check
      _
    $region19: #{ddpg_actor_forward.7} parent=1 // pred_check_branch
      %20 = sbr.rel (0) target = $region21
    $region20: #{ddpg_actor_forward.7} parent=1 // pred_region
      _
    $region21: #{ddpg_actor_forward.7} parent=1 // pred_fallthru
      _
    %v22 = vld [vmem:[%s0] sm:$0x1]
    %v23 = vld [vmem:[%s1] sm:$0xff]
    %v24 = vld [vmem:[%s1 + $0x8] sm:$0xff]
    %v25 = vld [vmem:[%s1 + $0x10] sm:$0xff]
    %v26 = vld [vmem:[%s1 + $0x18] sm:$0xff]
    %v27 = vld [vmem:[%s1 + $0x20] sm:$0xff]
    %v28 = vld [vmem:[%s1 + $0x28] sm:$0xff]
    %v29 = vld [vmem:[%s1 + $0x30] sm:$0xff]
    %v30 = vld [vmem:[%s1 + $0x38] sm:$0xff]
    %v31 = vld [vmem:[%s1 + $0x40] sm:$0xff]
    %v32 = vld [vmem:[%s1 + $0x48] sm:$0xff]
    %v33 = vld [vmem:[%s1 + $0x50] sm:$0xff]
    %v34 = vld [vmem:[%s1 + $0x58] sm:$0xff]
    %v35 = vld [vmem:[%s1 + $0x60] sm:$0xff]
    %v36 = vld [vmem:[%s1 + $0x68] sm:$0xff]
    %v37 = vld [vmem:[%s1 + $0x70] sm:$0xff]
    %v38 = vld [vmem:[%s1 + $0x78] sm:$0xff]
    %v39 = vld [vmem:[%s2] sm:$0xf]
    %v41 = vlaneseq
    %v42 = vshrl.u32 %v41, 7
    %v43 = vsub.s32 0, %v42
    %v44 = vrot.slane %v39, %v43
    %v45 = vlaneseq
    %v46 = vshrl.u32 %v45, 7
    %v47 = vsub.s32 1, %v46
    %v48 = vrot.slane %v39, %v47
    %v49 = vlaneseq
    %v50 = vshrl.u32 %v49, 7
    %v51 = vsub.s32 2, %v50
    %v52 = vrot.slane %v39, %v51
    %v53 = vlaneseq
    %v54 = vshrl.u32 %v53, 7
    %v55 = vsub.s32 3, %v54
    %v56 = vrot.slane %v39, %v55
    %v77 = vunpack.c.l.b16 %v23
    %v78 = vunpack.c.h.b16 %v23
    %v79 = vunpack.c.l.b16 %v24
    %v80 = vunpack.c.h.b16 %v24
    %v81 = vunpack.c.l.b16 %v25
    %v82 = vunpack.c.h.b16 %v25
    %v83 = vunpack.c.l.b16 %v26
    %v84 = vunpack.c.h.b16 %v26
    %v85 = vunpack.c.l.b16 %v27
    %v86 = vunpack.c.h.b16 %v27
    %v87 = vunpack.c.l.b16 %v28
    %v88 = vunpack.c.h.b16 %v28
    %v89 = vunpack.c.l.b16 %v29
    %v90 = vunpack.c.h.b16 %v29
    %v91 = vunpack.c.l.b16 %v30
    %v92 = vunpack.c.h.b16 %v30
    %v93 = vunpack.c.l.b16 %v31
    %v94 = vunpack.c.h.b16 %v31
    %v95 = vunpack.c.l.b16 %v32
    %v96 = vunpack.c.h.b16 %v32
    %v97 = vunpack.c.l.b16 %v33
    %v98 = vunpack.c.h.b16 %v33
    %v99 = vunpack.c.l.b16 %v34
    %v100 = vunpack.c.h.b16 %v34
    %v101 = vunpack.c.l.b16 %v35
    %v102 = vunpack.c.h.b16 %v35
    %v103 = vunpack.c.l.b16 %v36
    %v104 = vunpack.c.h.b16 %v36
    %v105 = vunpack.c.l.b16 %v37
    %v106 = vunpack.c.h.b16 %v37
    %v107 = vunpack.c.l.b16 %v38
    %v108 = vunpack.c.h.b16 %v38
    %v109 = vpack.c.b16 %v81, %v77
    %v110 = vpack.c.b16 %v82, %v78
    %v111 = vpack.c.b16 %v83, %v79
    %v112 = vpack.c.b16 %v84, %v80
    %v113 = vpack.c.b16 %v89, %v85
    %v114 = vpack.c.b16 %v90, %v86
    %v115 = vpack.c.b16 %v91, %v87
    %v116 = vpack.c.b16 %v92, %v88
    %v117 = vpack.c.b16 %v97, %v93
    %v118 = vpack.c.b16 %v98, %v94
    %v119 = vpack.c.b16 %v99, %v95
    %v120 = vpack.c.b16 %v100, %v96
    %v121 = vpack.c.b16 %v105, %v101
    %v122 = vpack.c.b16 %v106, %v102
    %v123 = vpack.c.b16 %v107, %v103
    %v124 = vpack.c.b16 %v108, %v104
    %vm141 = vcmask 523264
    %v143 = vsel %vm141, %v22, 0
    %145 = vmatprep.subr.bf16.mxu0 %v110
    %146 = vmatpush1.bf16.msra.mxu0 %v109
    %147 = vmatprep.subr.bf16.mxu0 %v114
    %148 = vmatpush1.bf16.msra.mxu0 %v113
    %149 = vmatprep.subr.bf16.mxu0 %v118
    %150 = vmatpush1.bf16.msra.mxu0 %v117
    %151 = vmatprep.subr.bf16.mxu0 %v122
    %152 = vmatpush1.bf16.msra.mxu0 %v121
    %153 = vmatprep.subr.bf16.mxu0 0
    %154 = vmatpush1.bf16.msra.mxu0 0
    %155 = vmatprep.subr.bf16.mxu0 0
    %156 = vmatpush1.bf16.msra.mxu0 0
    %157 = vmatprep.subr.bf16.mxu0 0
    %158 = vmatpush1.bf16.msra.mxu0 0
    %159 = vmatprep.subr.bf16.mxu0 0
    %160 = vmatpush1.bf16.msra.mxu0 0
    %161 = vmatprep.subr.bf16.mxu0 0
    %162 = vmatpush1.bf16.msra.mxu0 0
    %163 = vmatprep.subr.bf16.mxu0 0
    %164 = vmatpush1.bf16.msra.mxu0 0
    %165 = vmatprep.subr.bf16.mxu0 0
    %166 = vmatpush1.bf16.msra.mxu0 0
    %167 = vmatprep.subr.bf16.mxu0 0
    %168 = vmatpush1.bf16.msra.mxu0 0
    %169 = vmatprep.subr.bf16.mxu0 0
    %170 = vmatpush1.bf16.msra.mxu0 0
    %171 = vmatprep.subr.bf16.mxu0 0
    %172 = vmatpush1.bf16.msra.mxu0 0
    %173 = vmatprep.subr.bf16.mxu0 0
    %174 = vmatpush1.bf16.msra.mxu0 0
    %175 = vmatprep.subr.bf16.mxu0 0
    %176 = vmatpush1.bf16.msra.mxu0 0
    %177 = vmatprep.mubr.bf16.mxu0 0
    %178 = vmatmul.mubr.bf16.gmra.mrb[0].mxu0 %v143
    %v179 = vpop.f32.mrb[0].mxu0
    %v180 = vadd.f32 %v44, %v179
    %v181 = vpop.f32.mrb[0].mxu0
    %v182 = vadd.f32 %v48, %v181
    %v183 = vpop.f32.mrb[0].mxu0
    %v184 = vpop.f32.mrb[0].mxu0
    %185 = vdwg.mxu0
    %186 = vmatprep.subr.bf16.mxu0 %v112
    %187 = vmatpush1.bf16.msra.mxu0 %v111
    %188 = vmatprep.subr.bf16.mxu0 %v116
    %189 = vmatpush1.bf16.msra.mxu0 %v115
    %190 = vmatprep.subr.bf16.mxu0 %v120
    %191 = vmatpush1.bf16.msra.mxu0 %v119
    %192 = vmatprep.subr.bf16.mxu0 %v124
    %193 = vmatpush1.bf16.msra.mxu0 %v123
    %194 = vmatprep.subr.bf16.mxu0 0
    %195 = vmatpush1.bf16.msra.mxu0 0
    %196 = vmatprep.subr.bf16.mxu0 0
    %197 = vmatpush1.bf16.msra.mxu0 0
    %198 = vmatprep.subr.bf16.mxu0 0
    %199 = vmatpush1.bf16.msra.mxu0 0
    %200 = vmatprep.subr.bf16.mxu0 0
    %201 = vmatpush1.bf16.msra.mxu0 0
    %202 = vmatprep.subr.bf16.mxu0 0
    %203 = vmatpush1.bf16.msra.mxu0 0
    %204 = vmatprep.subr.bf16.mxu0 0
    %205 = vmatpush1.bf16.msra.mxu0 0
    %206 = vmatprep.subr.bf16.mxu0 0
    %207 = vmatpush1.bf16.msra.mxu0 0
    %208 = vmatprep.subr.bf16.mxu0 0
    %209 = vmatpush1.bf16.msra.mxu0 0
    %210 = vmatprep.subr.bf16.mxu0 0
    %211 = vmatpush1.bf16.msra.mxu0 0
    %212 = vmatprep.subr.bf16.mxu0 0
    %213 = vmatpush1.bf16.msra.mxu0 0
    %214 = vmatprep.subr.bf16.mxu0 0
    %215 = vmatpush1.bf16.msra.mxu0 0
    %216 = vmatprep.subr.bf16.mxu0 0
    %217 = vmatpush1.bf16.msra.mxu0 0
    %218 = vmatprep.mubr.bf16.mxu0 0
    %219 = vmatmul.mubr.bf16.gmra.mrb[0].mxu0 %v143
    %v220 = vpop.f32.mrb[0].mxu0
    %v221 = vadd.f32 %v52, %v220
    %v222 = vpop.f32.mrb[0].mxu0
    %v223 = vadd.f32 %v56, %v222
    %v224 = vpop.f32.mrb[0].mxu0
    %v225 = vpop.f32.mrb[0].mxu0
    %226 = vdwg.mxu0
    %v227 = vmax.f32 %v180, 0.0
    %v228 = vmax.f32 %v182, 0.0
    %v229 = vmax.f32 %v221, 0.0
    %v230 = vmax.f32 %v223, 0.0
    %v231 = vpack.c.bf16 %v227, %v227
    %v232 = vpack.c.bf16 %v228, %v228
    %v233 = vpack.c.bf16 %v229, %v229
    %v234 = vpack.c.bf16 %v230, %v230
    %v235 = vld [vmem:[%s3] sm:$0xf]
    %v236 = vld [vmem:[%s3 + $0x4] sm:$0xf]
    %v237 = vld [vmem:[%s3 + $0x8] sm:$0xf]
    %v238 = vld [vmem:[%s3 + $0xc] sm:$0xf]
    %v239 = vld [vmem:[%s3 + $0x10] sm:$0xf]
    %v240 = vld [vmem:[%s3 + $0x14] sm:$0xf]
    %v241 = vld [vmem:[%s3 + $0x18] sm:$0xf]
    %v242 = vld [vmem:[%s3 + $0x1c] sm:$0xf]
    %v243 = vld [vmem:[%s3 + $0x20] sm:$0xf]
    %v244 = vld [vmem:[%s3 + $0x24] sm:$0xf]
    %v245 = vld [vmem:[%s3 + $0x28] sm:$0xf]
    %v246 = vld [vmem:[%s3 + $0x2c] sm:$0xf]
    %v247 = vld [vmem:[%s3 + $0x30] sm:$0xf]
    %v248 = vld [vmem:[%s3 + $0x34] sm:$0xf]
    %v249 = vld [vmem:[%s3 + $0x38] sm:$0xf]
    %v250 = vld [vmem:[%s3 + $0x3c] sm:$0xf]
    %v251 = vld [vmem:[%s3 + $0x40] sm:$0xf]
    %v252 = vld [vmem:[%s3 + $0x44] sm:$0xf]
    %v253 = vld [vmem:[%s3 + $0x48] sm:$0xf]
    %v254 = vld [vmem:[%s3 + $0x4c] sm:$0xf]
    %v255 = vld [vmem:[%s3 + $0x50] sm:$0xf]
    %v256 = vld [vmem:[%s3 + $0x54] sm:$0xf]
    %v257 = vld [vmem:[%s3 + $0x58] sm:$0xf]
    %v258 = vld [vmem:[%s3 + $0x5c] sm:$0xf]
    %v259 = vld [vmem:[%s3 + $0x60] sm:$0xf]
    %v260 = vld [vmem:[%s3 + $0x64] sm:$0xf]
    %v261 = vld [vmem:[%s3 + $0x68] sm:$0xf]
    %v262 = vld [vmem:[%s3 + $0x6c] sm:$0xf]
    %v263 = vld [vmem:[%s3 + $0x70] sm:$0xf]
    %v264 = vld [vmem:[%s3 + $0x74] sm:$0xf]
    %v265 = vld [vmem:[%s3 + $0x78] sm:$0xf]
    %v266 = vld [vmem:[%s3 + $0x7c] sm:$0xf]
    %v267 = vld [vmem:[%s3 + $0x80] sm:$0xf]
    %v268 = vld [vmem:[%s3 + $0x84] sm:$0xf]
    %v269 = vld [vmem:[%s3 + $0x88] sm:$0xf]
    %v270 = vld [vmem:[%s3 + $0x8c] sm:$0xf]
    %v271 = vld [vmem:[%s3 + $0x90] sm:$0xf]
    %v272 = vld [vmem:[%s3 + $0x94] sm:$0xf]
    %v273 = vld [vmem:[%s3 + $0x98] sm:$0xf]
    %v274 = vld [vmem:[%s3 + $0x9c] sm:$0xf]
    %v275 = vld [vmem:[%s3 + $0xa0] sm:$0xf]
    %v276 = vld [vmem:[%s3 + $0xa4] sm:$0xf]
    %v277 = vld [vmem:[%s3 + $0xa8] sm:$0xf]
    %v278 = vld [vmem:[%s3 + $0xac] sm:$0xf]
    %v279 = vld [vmem:[%s3 + $0xb0] sm:$0xf]
    %v280 = vld [vmem:[%s3 + $0xb4] sm:$0xf]
    %v281 = vld [vmem:[%s3 + $0xb8] sm:$0xf]
    %v282 = vld [vmem:[%s3 + $0xbc] sm:$0xf]
    %v283 = vld [vmem:[%s3 + $0xc0] sm:$0xf]
    %v284 = vld [vmem:[%s3 + $0xc4] sm:$0xf]
    %v285 = vld [vmem:[%s3 + $0xc8] sm:$0xf]
    %v286 = vld [vmem:[%s3 + $0xcc] sm:$0xf]
    %v287 = vld [vmem:[%s3 + $0xd0] sm:$0xf]
    %v288 = vld [vmem:[%s3 + $0xd4] sm:$0xf]
    %v289 = vld [vmem:[%s3 + $0xd8] sm:$0xf]
    %v290 = vld [vmem:[%s3 + $0xdc] sm:$0xf]
    %v291 = vld [vmem:[%s3 + $0xe0] sm:$0xf]
    %v292 = vld [vmem:[%s3 + $0xe4] sm:$0xf]
    %v293 = vld [vmem:[%s3 + $0xe8] sm:$0xf]
    %v294 = vld [vmem:[%s3 + $0xec] sm:$0xf]
    %v295 = vld [vmem:[%s3 + $0xf0] sm:$0xf]
    %v296 = vld [vmem:[%s3 + $0xf4] sm:$0xf]
    %v297 = vld [vmem:[%s3 + $0xf8] sm:$0xf]
    %v298 = vld [vmem:[%s3 + $0xfc] sm:$0xf]
    %v299 = vld [vmem:[%s4] sm:$0x1]
    %v301 = vlaneseq
    %v302 = vshrl.u32 %v301, 7
    %v303 = vsub.s32 0, %v302
    %v304 = vrot.slane %v299, %v303
    %v370 = vunpack.c.l.b16 %v235
    %v371 = vunpack.c.l.b16 %v236
    %v372 = vunpack.c.l.b16 %v237
    %v373 = vunpack.c.l.b16 %v238
    %v374 = vunpack.c.l.b16 %v239
    %v375 = vunpack.c.l.b16 %v240
    %v376 = vunpack.c.l.b16 %v241
    %v377 = vunpack.c.l.b16 %v242
    %v378 = vunpack.c.l.b16 %v243
    %v379 = vunpack.c.l.b16 %v244
    %v380 = vunpack.c.l.b16 %v245
    %v381 = vunpack.c.l.b16 %v246
    %v382 = vunpack.c.l.b16 %v247
    %v383 = vunpack.c.l.b16 %v248
    %v384 = vunpack.c.l.b16 %v249
    %v385 = vunpack.c.l.b16 %v250
    %v386 = vunpack.c.l.b16 %v251
    %v387 = vunpack.c.l.b16 %v252
    %v388 = vunpack.c.l.b16 %v253
    %v389 = vunpack.c.l.b16 %v254
    %v390 = vunpack.c.l.b16 %v255
    %v391 = vunpack.c.l.b16 %v256
    %v392 = vunpack.c.l.b16 %v257
    %v393 = vunpack.c.l.b16 %v258
    %v394 = vunpack.c.l.b16 %v259
    %v395 = vunpack.c.l.b16 %v260
    %v396 = vunpack.c.l.b16 %v261
    %v397 = vunpack.c.l.b16 %v262
    %v398 = vunpack.c.l.b16 %v263
    %v399 = vunpack.c.l.b16 %v264
    %v400 = vunpack.c.l.b16 %v265
    %v401 = vunpack.c.l.b16 %v266
    %v402 = vunpack.c.l.b16 %v267
    %v403 = vunpack.c.l.b16 %v268
    %v404 = vunpack.c.l.b16 %v269
    %v405 = vunpack.c.l.b16 %v270
    %v406 = vunpack.c.l.b16 %v271
    %v407 = vunpack.c.l.b16 %v272
    %v408 = vunpack.c.l.b16 %v273
    %v409 = vunpack.c.l.b16 %v274
    %v410 = vunpack.c.l.b16 %v275
    %v411 = vunpack.c.l.b16 %v276
    %v412 = vunpack.c.l.b16 %v277
    %v413 = vunpack.c.l.b16 %v278
    %v414 = vunpack.c.l.b16 %v279
    %v415 = vunpack.c.l.b16 %v280
    %v416 = vunpack.c.l.b16 %v281
    %v417 = vunpack.c.l.b16 %v282
    %v418 = vunpack.c.l.b16 %v283
    %v419 = vunpack.c.l.b16 %v284
    %v420 = vunpack.c.l.b16 %v285
    %v421 = vunpack.c.l.b16 %v286
    %v422 = vunpack.c.l.b16 %v287
    %v423 = vunpack.c.l.b16 %v288
    %v424 = vunpack.c.l.b16 %v289
    %v425 = vunpack.c.l.b16 %v290
    %v426 = vunpack.c.l.b16 %v291
    %v427 = vunpack.c.l.b16 %v292
    %v428 = vunpack.c.l.b16 %v293
    %v429 = vunpack.c.l.b16 %v294
    %v430 = vunpack.c.l.b16 %v295
    %v431 = vunpack.c.l.b16 %v296
    %v432 = vunpack.c.l.b16 %v297
    %v433 = vunpack.c.l.b16 %v298
    %v434 = vpack.c.b16 %v371, %v370
    %v435 = vpack.c.b16 %v373, %v372
    %v436 = vpack.c.b16 %v375, %v374
    %v437 = vpack.c.b16 %v377, %v376
    %v438 = vpack.c.b16 %v379, %v378
    %v439 = vpack.c.b16 %v381, %v380
    %v440 = vpack.c.b16 %v383, %v382
    %v441 = vpack.c.b16 %v385, %v384
    %v442 = vpack.c.b16 %v387, %v386
    %v443 = vpack.c.b16 %v389, %v388
    %v444 = vpack.c.b16 %v391, %v390
    %v445 = vpack.c.b16 %v393, %v392
    %v446 = vpack.c.b16 %v395, %v394
    %v447 = vpack.c.b16 %v397, %v396
    %v448 = vpack.c.b16 %v399, %v398
    %v449 = vpack.c.b16 %v401, %v400
    %v450 = vpack.c.b16 %v403, %v402
    %v451 = vpack.c.b16 %v405, %v404
    %v452 = vpack.c.b16 %v407, %v406
    %v453 = vpack.c.b16 %v409, %v408
    %v454 = vpack.c.b16 %v411, %v410
    %v455 = vpack.c.b16 %v413, %v412
    %v456 = vpack.c.b16 %v415, %v414
    %v457 = vpack.c.b16 %v417, %v416
    %v458 = vpack.c.b16 %v419, %v418
    %v459 = vpack.c.b16 %v421, %v420
    %v460 = vpack.c.b16 %v423, %v422
    %v461 = vpack.c.b16 %v425, %v424
    %v462 = vpack.c.b16 %v427, %v426
    %v463 = vpack.c.b16 %v429, %v428
    %v464 = vpack.c.b16 %v431, %v430
    %v465 = vpack.c.b16 %v433, %v432
    %498 = vmatprep.subr.bf16.mxu0 0
    %499 = vmatpush1.bf16.msra.mxu0 %v434
    %500 = vmatprep.subr.bf16.mxu0 0
    %501 = vmatpush1.bf16.msra.mxu0 %v435
    %502 = vmatprep.subr.bf16.mxu0 0
    %503 = vmatpush1.bf16.msra.mxu0 %v436
    %504 = vmatprep.subr.bf16.mxu0 0
    %505 = vmatpush1.bf16.msra.mxu0 %v437
    %506 = vmatprep.subr.bf16.mxu0 0
    %507 = vmatpush1.bf16.msra.mxu0 %v438
    %508 = vmatprep.subr.bf16.mxu0 0
    %509 = vmatpush1.bf16.msra.mxu0 %v439
    %510 = vmatprep.subr.bf16.mxu0 0
    %511 = vmatpush1.bf16.msra.mxu0 %v440
    %512 = vmatprep.subr.bf16.mxu0 0
    %513 = vmatpush1.bf16.msra.mxu0 %v441
    %514 = vmatprep.subr.bf16.mxu0 0
    %515 = vmatpush1.bf16.msra.mxu0 %v442
    %516 = vmatprep.subr.bf16.mxu0 0
    %517 = vmatpush1.bf16.msra.mxu0 %v443
    %518 = vmatprep.subr.bf16.mxu0 0
    %519 = vmatpush1.bf16.msra.mxu0 %v444
    %520 = vmatprep.subr.bf16.mxu0 0
    %521 = vmatpush1.bf16.msra.mxu0 %v445
    %522 = vmatprep.subr.bf16.mxu0 0
    %523 = vmatpush1.bf16.msra.mxu0 %v446
    %524 = vmatprep.subr.bf16.mxu0 0
    %525 = vmatpush1.bf16.msra.mxu0 %v447
    %526 = vmatprep.subr.bf16.mxu0 0
    %527 = vmatpush1.bf16.msra.mxu0 %v448
    %528 = vmatprep.subr.bf16.mxu0 0
    %529 = vmatpush1.bf16.msra.mxu0 %v449
    %530 = vmatprep.mubr.bf16.mxu0 %v232
    %531 = vmatmul.mubr.bf16.gmra.mrb[0].mxu0 %v231
    %v532 = vpop.f32.mrb[0].mxu0
    %v533 = vadd.f32 %v304, %v532
    %v534 = vpop.f32.mrb[0].mxu0
    %v535 = vpop.f32.mrb[0].mxu0
    %v536 = vpop.f32.mrb[0].mxu0
    %537 = vdwg.mxu0
    %538 = vmatprep.subr.bf16.mxu0 0
    %539 = vmatpush1.bf16.msra.mxu0 %v450
    %540 = vmatprep.subr.bf16.mxu0 0
    %541 = vmatpush1.bf16.msra.mxu0 %v451
    %542 = vmatprep.subr.bf16.mxu0 0
    %543 = vmatpush1.bf16.msra.mxu0 %v452
    %544 = vmatprep.subr.bf16.mxu0 0
    %545 = vmatpush1.bf16.msra.mxu0 %v453
    %546 = vmatprep.subr.bf16.mxu0 0
    %547 = vmatpush1.bf16.msra.mxu0 %v454
    %548 = vmatprep.subr.bf16.mxu0 0
    %549 = vmatpush1.bf16.msra.mxu0 %v455
    %550 = vmatprep.subr.bf16.mxu0 0
    %551 = vmatpush1.bf16.msra.mxu0 %v456
    %552 = vmatprep.subr.bf16.mxu0 0
    %553 = vmatpush1.bf16.msra.mxu0 %v457
    %554 = vmatprep.subr.bf16.mxu0 0
    %555 = vmatpush1.bf16.msra.mxu0 %v458
    %556 = vmatprep.subr.bf16.mxu0 0
    %557 = vmatpush1.bf16.msra.mxu0 %v459
    %558 = vmatprep.subr.bf16.mxu0 0
    %559 = vmatpush1.bf16.msra.mxu0 %v460
    %560 = vmatprep.subr.bf16.mxu0 0
    %561 = vmatpush1.bf16.msra.mxu0 %v461
    %562 = vmatprep.subr.bf16.mxu0 0
    %563 = vmatpush1.bf16.msra.mxu0 %v462
    %564 = vmatprep.subr.bf16.mxu0 0
    %565 = vmatpush1.bf16.msra.mxu0 %v463
    %566 = vmatprep.subr.bf16.mxu0 0
    %567 = vmatpush1.bf16.msra.mxu0 %v464
    %568 = vmatprep.subr.bf16.mxu0 0
    %569 = vmatpush1.bf16.msra.mxu0 %v465
    %570 = vmatprep.mubr.bf16.mxu0 %v234
    %571 = vmatmul.mubr.bf16.gmra.mrb[0].mxu0 %v233
    %v572 = vpop.f32.mrb[0].mxu0
    %v573 = vadd.f32 %v533, %v572
    %v574 = vpop.f32.mrb[0].mxu0
    %v575 = vpop.f32.mrb[0].mxu0
    %v576 = vpop.f32.mrb[0].mxu0
    %577 = vdwg.mxu0
    %v578 = vtanh.pop %v573
    %579 = vst [vmem:[#allocation2] sm:$0x3] %v578
    // Predicated region
    $region22: #{ddpg_actor_forward.7} parent=1 // pred_check
      _
    $region23: #{ddpg_actor_forward.7} parent=1 // pred_check_branch
      %581 = sbr.rel (0) target = $region25
    $region24: #{ddpg_actor_forward.7} parent=1 // pred_region
      %s583 = ssub.s32 32, 32
      %584 = vsyncadd [#allocation3], %s583
      %s586 = sshll.u32 [#allocation2], 4
      %s587 = int_to_ptr.vmem [resolvable:$true] %s586
      %589 = dma.vmem_to_hbm [thread:$0]  %s587, 32, %s5, [#allocation3]
    $region25: #{ddpg_actor_forward.7} parent=1 // pred_fallthru
      _
    // Predicated region
    $region26: #{ddpg_actor_forward.7} parent=1 // pred_check
      _
    $region27: #{ddpg_actor_forward.7} parent=1 // pred_check_branch
      %591 = sbr.rel (0) target = $region29
    $region28: #{ddpg_actor_forward.7} parent=1 // pred_region
      %592 = dma.done [#allocation3], 32
    $region29: #{ddpg_actor_forward.7} parent=1 // pred_fallthru
      _
    %593 = vsyncpa [#allocation3], 1

</llo_original>
